<compile_context>
chip_gen: v6e
topology: v6e:2x2x1
jax: 0.10.0
libtpu: 0.0.40
codegen_flags: <defaults>
</compile_context>

<pallas_src>
import jax
import jax.numpy as jnp
from jax import lax
from jax.experimental import pallas as pl
from jax.experimental.pallas import tpu as pltpu

# ---------------- config (synthetic, consistent with the module) ----------------
GNN_INPUT_DIM = 16     # config.gnn_input_dim
GNN_HIDDEN_DIM = 16    # config.gnn_hidden_dim
GNN_HEADS = 4          # config.gnn_head
GNN_OUTPUT_DIM = 128   # config.gnn_output_dim (fc head expects 128)
HD = GNN_HIDDEN_DIM * GNN_HEADS          # 64

N_NODES = 16
N_GRAPHS = 2
N_EDGES = 32
HN = GNN_HEADS * N_NODES                 # 64  (lane-dense logit width)
SCORE_W = HD + 2 * HN                    # 192 = features | dst-expanded | src-expanded

_NEG = -1e30
_LN_EPS = 1e-5
_GAT_SLOPE = 0.2    # GATConv internal LeakyReLU negative_slope
_RELU_SLOPE = 0.01  # nn.LeakyReLU default negative_slope

# packed head-weight row offsets (every stage zero-padded to 128 lanes / 128 K):
#   flat(64x128) | fc1(128x64) | fc2(64x32, K padded to 128) | fc3(32x1, K padded to 128)
_H0, _H1, _H2, _H3, _H4 = 0, HD, HD + 128, HD + 256, HD + 384   # 0, 64, 192, 320, 448


def _leaky(x, slope):
    return jnp.where(x > 0, x, slope * x)


def _layer_norm(x, gamma, beta):
    # var = E[x^2] - mu^2: the two cross-lane reductions are independent.
    mu = jnp.mean(x, axis=1, keepdims=True)
    ex2 = jnp.mean(x * x, axis=1, keepdims=True)
    var = ex2 - mu * mu
    return (x - mu) * lax.rsqrt(var + _LN_EPS) * gamma + beta


def explainer_kernel(x_ref, adj_ref, boh_ref, wg0_ref, wg12_ref, consts_ref,
                     bd_ref, rowp_ref, hw_ref, hb_ref, out_ref):
    f32 = jnp.float32
    bf16 = jnp.bfloat16
    N = adj_ref.shape[0]
    H = GNN_HEADS
    hn = H * N

    # --- constants, computed / loaded once and reused by all 3 layers ---
    # additive attention mask in the lane-dense (N, H*N) logit layout.
    neg_hn = jnp.tile((1.0 - adj_ref[...]) * _NEG, (1, H))          # (N, HN) f32
    blockones = consts_ref[0]                                        # (HN, HN) bf16
    agg_mask = consts_ref[1]                                         # (HN, HD) bf16
    bd_mask = bd_ref[...]                                            # (N, HN)  bf16
    rowp = rowp_ref[...]                                             # (9, HD)  f32

    h = x_ref[...]                                                   # (N, 16) f32
    for l in range(3):
        wg = wg0_ref[...] if l == 0 else wg12_ref[l - 1]             # (K, 192) bf16
        # fused GEMM: node features | head-expanded dst scores | head-expanded src scores.
        hw = jnp.dot(h.astype(bf16), wg, preferred_element_type=f32)  # (N, 192)
        feat = hw[:, :HD]                                            # (N, HD)
        dexp = hw[:, HD:HD + hn]                                     # dexp[i, h*N+j] = a_dst.Wx_i
        sexp = hw[:, HD + hn:HD + 2 * hn]                            # sexp[i, h*N+j] = a_src.Wx_i
        # src row r[h*N+j] = a_src.Wx_j via block-diag extract + sublane reduce (no transpose).
        r = jnp.sum(sexp * bd_mask, axis=0, keepdims=True)           # (1, HN)
        # e[i, h*N+j] = leaky(a_dst.Wx_i + a_src.Wx_j), masked additively.
        e = _leaky(dexp + r, _GAT_SLOPE) + neg_hn                    # (N, HN)
        # global row max is a valid shift for every per-head segment (invariant:
        # self-loops in adj guarantee >=1 unmasked entry per row per head).
        m = jnp.max(e, axis=-1, keepdims=True)                       # (N, 1)
        p = jnp.exp(e - m)                                           # masked entries -> exactly 0
        # per-head softmax denominators: one MXU matmul against block-ones.
        denom = jnp.dot(p.astype(bf16), blockones, preferred_element_type=f32)
        alpha = p * pl.reciprocal(denom, approx=True)                # (N, HN)
        # aggregation: single matmul against block-diagonal-masked tile(feat).
        tiled = (jnp.tile(feat, (H, 1)) * agg_mask).astype(bf16)     # (HN, HD)
        g = jnp.dot(alpha.astype(bf16), tiled, preferred_element_type=f32)   # (N, HD)
        g = g + rowp[3 * l:3 * l + 1, :]
        g = _layer_norm(g, rowp[3 * l + 1:3 * l + 2, :], rowp[3 * l + 2:3 * l + 3, :])
        if l < 2:
            g = _leaky(g, _RELU_SLOPE)
        h = g

    # --- global mean pool per graph (boh rows pre-scaled by 1/count -> exact mean) ---
    pooled = jnp.dot(boh_ref[...].astype(bf16), h.astype(bf16),
                     preferred_element_type=f32)                      # (B, HD)

    # --- flat Linear(HD,128) + fc head [128->64, 64->32, ReLU, 32->1]; full 128-lane width ---
    z = jnp.dot(pooled.astype(bf16), hw_ref[_H0:_H1, :], preferred_element_type=f32) + hb_ref[0:1, :]
    z = jnp.dot(z.astype(bf16), hw_ref[_H1:_H2, :], preferred_element_type=f32) + hb_ref[1:2, :]
    z = jnp.dot(z.astype(bf16), hw_ref[_H2:_H3, :], preferred_element_type=f32) + hb_ref[2:3, :]
    z = jnp.maximum(z, 0.0)
    z = jnp.dot(z.astype(bf16), hw_ref[_H3:_H4, :], preferred_element_type=f32) + hb_ref[3:4, :]
    out_ref[...] = jax.nn.sigmoid(z[:, 0:1])                          # slice valid column once


@jax.jit
def explainer_forward(x, adj, batch_onehot, packed):
    """x: (G,N,IN)  adj: (G,N,N)  batch_onehot: (G,B,N)  ->  (G,B,1)."""
    wg0, wg12, consts, bd_mask, rowp, head_w, head_b = packed
    G, n, in_dim = x.shape
    B = batch_onehot.shape[1]
    # exact mean pool: pre-normalize the pooling one-hot by 1/count in the wrapper.
    counts = jnp.maximum(jnp.sum(batch_onehot, axis=2, keepdims=True), 1.0)
    boh_scaled = batch_onehot / counts

    def full(a):
        return pl.BlockSpec(a.shape, lambda g, _nd=a.ndim: (0,) * _nd)

    return pl.pallas_call(
        explainer_kernel,
        grid=(G,),
        out_shape=jax.ShapeDtypeStruct((G, B, 1), jnp.float32),
        in_specs=[
            pl.BlockSpec((None, n, in_dim), lambda g: (g, 0, 0)),   # x
            pl.BlockSpec((None, n, n), lambda g: (g, 0, 0)),        # adj
            pl.BlockSpec((None, B, n), lambda g: (g, 0, 0)),        # boh (pre-scaled)
            full(wg0), full(wg12), full(consts), full(bd_mask),
            full(rowp), full(head_w), full(head_b),
        ],
        out_specs=pl.BlockSpec((None, B, 1), lambda g: (g, 0, 0)),
        compiler_params=pltpu.CompilerParams(dimension_semantics=("parallel",)),
    )(x, adj, boh_scaled, wg0, wg12, consts, bd_mask, rowp, head_w, head_b)


def init_params(key):
    ks = jax.random.split(key, 16)
    s = 0.1
    f32 = jnp.float32

    def W(k, shape):
        return (s * jax.random.normal(k, shape)).astype(f32)

    params = []
    in_dims = [GNN_INPUT_DIM, HD, HD]
    for li in range(3):
        kw, ks_, kd = jax.random.split(ks[li], 3)
        params += [
            W(kw, (in_dims[li], HD)),                  # GAT weight
            W(ks_, (GNN_HIDDEN_DIM, GNN_HEADS)),       # a_src
            W(kd, (GNN_HIDDEN_DIM, GNN_HEADS)),        # a_dst
            jnp.zeros((1, HD), f32),                   # conv bias
            jnp.ones((1, HD), f32),                    # layernorm gamma
            jnp.zeros((1, HD), f32),                   # layernorm beta
        ]
    params += [W(ks[3], (HD, GNN_OUTPUT_DIM)), jnp.zeros((1, GNN_OUTPUT_DIM), f32)]
    params += [W(ks[4], (128, 64)), jnp.zeros((1, 64), f32)]
    params += [W(ks[5], (64, 32)), jnp.zeros((1, 32), f32)]
    params += [W(ks[6], (32, 1)), jnp.zeros((1, 1), f32)]
    return params


def pack_params(params):
    """One-time packing of the 24 parameter arrays into 7 VMEM operands."""
    f32, bf16 = jnp.float32, jnp.bfloat16
    H, D, N = GNN_HEADS, GNN_HIDDEN_DIM, N_NODES
    in_dims = [GNN_INPUT_DIM, HD, HD]

    # expansion one-hot R[h, h*N + j] = 1  (folds the per-head dst/src expansion
    # into the fused GEMM weights at pack time).
    col_head = jnp.arange(HN) // N                                     # (HN,)
    R = (col_head[None, :] == jnp.arange(H)[:, None]).astype(f32)      # (H, HN)

    wg_layers, rowp_rows = [], []
    idx = 0
    for l in range(3):
        w, a_src, a_dst, bias, gamma, beta = params[idx:idx + 6]
        idx += 6
        A_src = jnp.zeros((HD, H), f32)
        A_dst = jnp.zeros((HD, H), f32)
        for h in range(H):
            lo = h * D
            A_src = A_src.at[lo:lo + D, h].set(a_src[:, h])
            A_dst = A_dst.at[lo:lo + D, h].set(a_dst[:, h])
        wd_exp = w @ A_dst @ R       # (in_dim, HN): dst scores, head-expanded
        ws_exp = w @ A_src @ R       # (in_dim, HN): src scores, head-expanded
        wg_layers.append(jnp.concatenate([w, wd_exp, ws_exp], axis=1))  # (in_dim, SCORE_W)
        rowp_rows += [bias.reshape(1, HD), gamma.reshape(1, HD), beta.reshape(1, HD)]
    wg0 = wg_layers[0].astype(bf16)                                    # (16, 192)
    wg12 = jnp.stack(wg_layers[1:], axis=0).astype(bf16)               # (2, 64, 192)
    rowp = jnp.concatenate(rowp_rows, axis=0).astype(f32)              # (9, 64)

    # constants for the lane-dense attention layout.
    blockones = (col_head[:, None] == col_head[None, :]).astype(bf16)  # (HN, HN) per-head sum
    feat_head = jnp.arange(HD) // D
    agg_mask = (col_head[:, None] == feat_head[None, :]).astype(bf16)  # (HN, HD) block-diag agg
    consts = jnp.stack([blockones, agg_mask], axis=0)                  # (2, HN, HN)
    node_of_col = jnp.arange(HN) % N
    bd_mask = (jnp.arange(N)[:, None] == node_of_col[None, :]).astype(bf16)  # (N, HN)

    # head weights, zero-padded so the whole GEMM chain stays 128 lanes wide.
    wf, bf_, wa, ba, wb, bb, wc, bc = params[idx:idx + 8]
    head_w = jnp.zeros((_H4, 128), f32)
    head_w = head_w.at[_H0:_H0 + HD, :].set(wf)        # flat: (64, 128)
    head_w = head_w.at[_H1:_H1 + 128, 0:64].set(wa)    # fc1:  (128, 64)
    head_w = head_w.at[_H2:_H2 + 64, 0:32].set(wb)     # fc2:  (64, 32), K padded to 128
    head_w = head_w.at[_H3:_H3 + 32, 0:1].set(wc)      # fc3:  (32, 1),  K padded to 128
    head_w = head_w.astype(bf16)                       # (448, 128)
    head_b = jnp.zeros((4, 128), f32)
    head_b = head_b.at[0, 0:128].set(bf_.reshape(-1))
    head_b = head_b.at[1, 0:64].set(ba.reshape(-1))
    head_b = head_b.at[2, 0:32].set(bb.reshape(-1))
    head_b = head_b.at[3, 0:1].set(bc.reshape(-1))     # (4, 128)
    return wg0, wg12, consts, bd_mask, rowp, head_w, head_b


if __name__ == "__main__":
    key = jax.random.PRNGKey(0)
    k_x, k_e, k_p = jax.random.split(key, 3)

    G = 2  # graph-batches stacked per pallas_call (parallel grid axis)
    k_xs = jax.random.split(k_x, G)
    k_es = jax.random.split(k_e, G)
    xs, adjs, bohs = [], [], []
    for g in range(G):
        # node features
        x_g = jax.random.normal(k_xs[g], (N_NODES, GNN_INPUT_DIM), dtype=jnp.float32)
        # random edge_index (2, E) -> dense adjacency mask with self-loops
        edge_index = jax.random.randint(k_es[g], (2, N_EDGES), 0, N_NODES)
        src, dst = edge_index[0], edge_index[1]
        adj_g = jnp.zeros((N_NODES, N_NODES), jnp.float32).at[dst, src].set(1.0)
        adj_g = jnp.clip(adj_g + jnp.eye(N_NODES, dtype=jnp.float32), 0.0, 1.0)
        # batch assignment: first half graph 0, second half graph 1 -> one-hot (B, N)
        batch = jnp.concatenate([jnp.zeros(N_NODES // 2, jnp.int32),
                                 jnp.ones(N_NODES - N_NODES // 2, jnp.int32)])
        boh_g = jax.nn.one_hot(batch, N_GRAPHS, dtype=jnp.float32).T
        xs.append(x_g); adjs.append(adj_g); bohs.append(boh_g)

    x = jnp.stack(xs)              # (G, N, 16)
    adj = jnp.stack(adjs)          # (G, N, N)
    batch_onehot = jnp.stack(bohs)  # (G, B, N)

    params = init_params(k_p)
    packed = pack_params(params)   # one-time parameter packing (outside the jitted forward)

    out = explainer_forward(x, adj, batch_onehot, packed)
    out = jax.block_until_ready(out)

    assert out.shape == (G, N_GRAPHS, 1)
    assert bool(jnp.all(jnp.isfinite(out)))
    assert bool(jnp.all((out > 0.0) & (out < 1.0)))
    print("KERNEL_OK")
</pallas_src>

<mosaic_0001>
module attributes {stable_mosaic.version = 11 : i64} {
  func.func @explainer_kernel(%arg0: i32, %arg1: memref<1x16x16xf32, #tpu.memory_space<vmem>>, %arg2: memref<1x16x16xf32, #tpu.memory_space<vmem>>, %arg3: memref<1x2x16xf32, #tpu.memory_space<vmem>>, %arg4: memref<16x192xbf16, #tpu.memory_space<vmem>>, %arg5: memref<2x64x192xbf16, #tpu.memory_space<vmem>>, %arg6: memref<2x64x64xbf16, #tpu.memory_space<vmem>>, %arg7: memref<16x64xbf16, #tpu.memory_space<vmem>>, %arg8: memref<9x64xf32, #tpu.memory_space<vmem>>, %arg9: memref<448x128xbf16, #tpu.memory_space<vmem>>, %arg10: memref<4x128xf32, #tpu.memory_space<vmem>>, %arg11: memref<1x2x1xf32, #tpu.memory_space<vmem>>) attributes {dimension_semantics = [#tpu.dimension_semantics<parallel>], iteration_bounds = array<i64: 2>, scalar_prefetch = 0 : i64, scratch_operands = 0 : i64, tpu.core_type = #tpu.core_type<tc>, window_params = [{transform_indices = @transform_0, window_bounds = array<i64: 1, 16, 16>}, {transform_indices = @transform_1, window_bounds = array<i64: 1, 16, 16>}, {transform_indices = @transform_2, window_bounds = array<i64: 1, 2, 16>}, {pipeline_mode = #tpu.pipeline_mode<synchronous>, transform_indices = @transform_3, window_bounds = array<i64: 16, 192>}, {pipeline_mode = #tpu.pipeline_mode<synchronous>, transform_indices = @transform_4, window_bounds = array<i64: 2, 64, 192>}, {pipeline_mode = #tpu.pipeline_mode<synchronous>, transform_indices = @transform_5, window_bounds = array<i64: 2, 64, 64>}, {pipeline_mode = #tpu.pipeline_mode<synchronous>, transform_indices = @transform_6, window_bounds = array<i64: 16, 64>}, {pipeline_mode = #tpu.pipeline_mode<synchronous>, transform_indices = @transform_7, window_bounds = array<i64: 9, 64>}, {pipeline_mode = #tpu.pipeline_mode<synchronous>, transform_indices = @transform_8, window_bounds = array<i64: 448, 128>}, {pipeline_mode = #tpu.pipeline_mode<synchronous>, transform_indices = @transform_9, window_bounds = array<i64: 4, 128>}, {transform_indices = @transform_10, window_bounds = array<i64: 1, 2, 1>}]} {
    %c0 = arith.constant 0 : index
    %c0_0 = arith.constant 0 : index
    %c0_1 = arith.constant 0 : index
    %0 = vector.load %arg2[%c0, %c0_0, %c0_1] : memref<1x16x16xf32, #tpu.memory_space<vmem>>, vector<1x16x16xf32>
    %1 = vector.shape_cast %0 : vector<1x16x16xf32> to vector<16x16xf32>
    %cst = arith.constant 1.000000e+00 : f32
    %2 = vector.broadcast %cst : f32 to vector<16x16xf32>
    %3 = arith.subf %2, %1 : vector<16x16xf32>
    %cst_2 = arith.constant -1.000000e+30 : f32
    %4 = vector.broadcast %cst_2 : f32 to vector<16x16xf32>
    %5 = arith.mulf %3, %4 : vector<16x16xf32>
    %6 = tpu.concatenate %5, %5, %5, %5 in 1 : vector<16x16xf32>, vector<16x16xf32>, vector<16x16xf32>, vector<16x16xf32> -> vector<16x64xf32>
    %c0_3 = arith.constant 0 : index
    %c0_4 = arith.constant 0 : index
    %c0_5 = arith.constant 0 : index
    %7 = vector.load %arg6[%c0_3, %c0_4, %c0_5] : memref<2x64x64xbf16, #tpu.memory_space<vmem>>, vector<1x64x64xbf16>
    %8 = vector.shape_cast %7 : vector<1x64x64xbf16> to vector<64x64xbf16>
    %c1 = arith.constant 1 : index
    %c0_6 = arith.constant 0 : index
    %c0_7 = arith.constant 0 : index
    %9 = vector.load %arg6[%c1, %c0_6, %c0_7] : memref<2x64x64xbf16, #tpu.memory_space<vmem>>, vector<1x64x64xbf16>
    %10 = vector.shape_cast %9 : vector<1x64x64xbf16> to vector<64x64xbf16>
    %c0_8 = arith.constant 0 : index
    %c0_9 = arith.constant 0 : index
    %11 = vector.load %arg7[%c0_8, %c0_9] : memref<16x64xbf16, #tpu.memory_space<vmem>>, vector<16x64xbf16>
    %c0_10 = arith.constant 0 : index
    %c0_11 = arith.constant 0 : index
    %12 = vector.load %arg8[%c0_10, %c0_11] : memref<9x64xf32, #tpu.memory_space<vmem>>, vector<9x64xf32>
    %c0_12 = arith.constant 0 : index
    %c0_13 = arith.constant 0 : index
    %c0_14 = arith.constant 0 : index
    %13 = vector.load %arg1[%c0_12, %c0_13, %c0_14] : memref<1x16x16xf32, #tpu.memory_space<vmem>>, vector<1x16x16xf32>
    %14 = vector.shape_cast %13 : vector<1x16x16xf32> to vector<16x16xf32>
    %c0_15 = arith.constant 0 : index
    %c0_16 = arith.constant 0 : index
    %15 = vector.load %arg4[%c0_15, %c0_16] : memref<16x192xbf16, #tpu.memory_space<vmem>>, vector<16x192xbf16>
    %16 = arith.truncf %14 : vector<16x16xf32> to vector<16x16xbf16>
    %cst_17 = arith.constant dense<0.000000e+00> : vector<16x192xf32>
    %17 = tpu.matmul %16, %15, %cst_17 {dimension_numbers = #tpu.dot_dimension_numbers<[1], [0], [0], [1], [0, 0, 1, 1], [], []>} : vector<16x16xbf16>, vector<16x192xbf16>, vector<16x192xf32> -> vector<16x192xf32>
    %18 = vector.extract_strided_slice %17 {offsets = [0, 0], sizes = [16, 64], strides = [1, 1]} : vector<16x192xf32> to vector<16x64xf32>
    %19 = vector.extract_strided_slice %17 {offsets = [0, 64], sizes = [16, 64], strides = [1, 1]} : vector<16x192xf32> to vector<16x64xf32>
    %20 = vector.extract_strided_slice %17 {offsets = [0, 128], sizes = [16, 64], strides = [1, 1]} : vector<16x192xf32> to vector<16x64xf32>
    %21 = arith.extf %11 : vector<16x64xbf16> to vector<16x64xf32>
    %22 = arith.mulf %20, %21 : vector<16x64xf32>
    %cst_18 = arith.constant dense<0.000000e+00> : vector<64xf32>
    %23 = vector.multi_reduction <add>, %22, %cst_18 [0] : vector<16x64xf32> to vector<64xf32>
    %24 = vector.shape_cast %23 : vector<64xf32> to vector<1x64xf32>
    %25 = vector.broadcast %24 : vector<1x64xf32> to vector<16x64xf32>
    %26 = arith.addf %19, %25 : vector<16x64xf32>
    %cst_19 = arith.constant 0.000000e+00 : f32
    %27 = vector.broadcast %cst_19 : f32 to vector<16x64xf32>
    %28 = arith.cmpf ogt, %26, %27 : vector<16x64xf32>
    %cst_20 = arith.constant 2.000000e-01 : f32
    %29 = vector.broadcast %cst_20 : f32 to vector<16x64xf32>
    %30 = arith.mulf %29, %26 : vector<16x64xf32>
    %31 = arith.select %28, %26, %30 : vector<16x64xi1>, vector<16x64xf32>
    %32 = arith.addf %31, %6 : vector<16x64xf32>
    %cst_21 = arith.constant dense<0xFF800000> : vector<16xf32>
    %33 = vector.multi_reduction <maximumf>, %32, %cst_21 [1] : vector<16x64xf32> to vector<16xf32>
    %34 = vector.shape_cast %33 : vector<16xf32> to vector<16x1xf32>
    %35 = vector.broadcast %34 : vector<16x1xf32> to vector<16x64xf32>
    %36 = arith.subf %32, %35 : vector<16x64xf32>
    %37 = math.exp %36 : vector<16x64xf32>
    %38 = arith.truncf %37 : vector<16x64xf32> to vector<16x64xbf16>
    %cst_22 = arith.constant dense<0.000000e+00> : vector<16x64xf32>
    %39 = tpu.matmul %38, %8, %cst_22 {dimension_numbers = #tpu.dot_dimension_numbers<[1], [0], [0], [1], [0, 0, 1, 1], [], []>} : vector<16x64xbf16>, vector<64x64xbf16>, vector<16x64xf32> -> vector<16x64xf32>
    %40 = tpu.reciprocal %39 {approx = true} : vector<16x64xf32> -> vector<16x64xf32>
    %41 = arith.mulf %37, %40 : vector<16x64xf32>
    %42 = tpu.concatenate %18, %18, %18, %18 in 0 : vector<16x64xf32>, vector<16x64xf32>, vector<16x64xf32>, vector<16x64xf32> -> vector<64x64xf32>
    %43 = arith.extf %10 : vector<64x64xbf16> to vector<64x64xf32>
    %44 = arith.mulf %42, %43 : vector<64x64xf32>
    %45 = arith.truncf %44 : vector<64x64xf32> to vector<64x64xbf16>
    %46 = arith.truncf %41 : vector<16x64xf32> to vector<16x64xbf16>
    %cst_23 = arith.constant dense<0.000000e+00> : vector<16x64xf32>
    %47 = tpu.matmul %46, %45, %cst_23 {dimension_numbers = #tpu.dot_dimension_numbers<[1], [0], [0], [1], [0, 0, 1, 1], [], []>} : vector<16x64xbf16>, vector<64x64xbf16>, vector<16x64xf32> -> vector<16x64xf32>
    %48 = vector.extract_strided_slice %12 {offsets = [0, 0], sizes = [1, 64], strides = [1, 1]} : vector<9x64xf32> to vector<1x64xf32>
    %49 = vector.broadcast %48 : vector<1x64xf32> to vector<16x64xf32>
    %50 = arith.addf %47, %49 : vector<16x64xf32>
    %51 = vector.extract_strided_slice %12 {offsets = [1, 0], sizes = [1, 64], strides = [1, 1]} : vector<9x64xf32> to vector<1x64xf32>
    %52 = vector.extract_strided_slice %12 {offsets = [2, 0], sizes = [1, 64], strides = [1, 1]} : vector<9x64xf32> to vector<1x64xf32>
    %cst_24 = arith.constant dense<0.000000e+00> : vector<16xf32>
    %53 = vector.multi_reduction <add>, %50, %cst_24 [1] : vector<16x64xf32> to vector<16xf32>
    %54 = vector.shape_cast %53 : vector<16xf32> to vector<16x1xf32>
    %cst_25 = arith.constant 6.400000e+01 : f32
    %55 = vector.broadcast %cst_25 : f32 to vector<16x1xf32>
    %56 = arith.divf %54, %55 : vector<16x1xf32>
    %57 = arith.mulf %50, %50 : vector<16x64xf32>
    %cst_26 = arith.constant dense<0.000000e+00> : vector<16xf32>
    %58 = vector.multi_reduction <add>, %57, %cst_26 [1] : vector<16x64xf32> to vector<16xf32>
    %59 = vector.shape_cast %58 : vector<16xf32> to vector<16x1xf32>
    %cst_27 = arith.constant 6.400000e+01 : f32
    %60 = vector.broadcast %cst_27 : f32 to vector<16x1xf32>
    %61 = arith.divf %59, %60 : vector<16x1xf32>
    %62 = arith.mulf %56, %56 : vector<16x1xf32>
    %63 = arith.subf %61, %62 : vector<16x1xf32>
    %64 = vector.broadcast %56 : vector<16x1xf32> to vector<16x64xf32>
    %65 = arith.subf %50, %64 : vector<16x64xf32>
    %cst_28 = arith.constant 9.99999974E-6 : f32
    %66 = vector.broadcast %cst_28 : f32 to vector<16x1xf32>
    %67 = arith.addf %63, %66 : vector<16x1xf32>
    %68 = math.rsqrt %67 : vector<16x1xf32>
    %69 = vector.broadcast %68 : vector<16x1xf32> to vector<16x64xf32>
    %70 = arith.mulf %65, %69 : vector<16x64xf32>
    %71 = vector.broadcast %51 : vector<1x64xf32> to vector<16x64xf32>
    %72 = arith.mulf %70, %71 : vector<16x64xf32>
    %73 = vector.broadcast %52 : vector<1x64xf32> to vector<16x64xf32>
    %74 = arith.addf %72, %73 : vector<16x64xf32>
    %cst_29 = arith.constant 0.000000e+00 : f32
    %75 = vector.broadcast %cst_29 : f32 to vector<16x64xf32>
    %76 = arith.cmpf ogt, %74, %75 : vector<16x64xf32>
    %cst_30 = arith.constant 0.00999999977 : f32
    %77 = vector.broadcast %cst_30 : f32 to vector<16x64xf32>
    %78 = arith.mulf %77, %74 : vector<16x64xf32>
    %79 = arith.select %76, %74, %78 : vector<16x64xi1>, vector<16x64xf32>
    %c0_31 = arith.constant 0 : index
    %c0_32 = arith.constant 0 : index
    %c0_33 = arith.constant 0 : index
    %80 = vector.load %arg5[%c0_31, %c0_32, %c0_33] : memref<2x64x192xbf16, #tpu.memory_space<vmem>>, vector<1x64x192xbf16>
    %81 = vector.shape_cast %80 : vector<1x64x192xbf16> to vector<64x192xbf16>
    %82 = arith.truncf %79 : vector<16x64xf32> to vector<16x64xbf16>
    %cst_34 = arith.constant dense<0.000000e+00> : vector<16x192xf32>
    %83 = tpu.matmul %82, %81, %cst_34 {dimension_numbers = #tpu.dot_dimension_numbers<[1], [0], [0], [1], [0, 0, 1, 1], [], []>} : vector<16x64xbf16>, vector<64x192xbf16>, vector<16x192xf32> -> vector<16x192xf32>
    %84 = vector.extract_strided_slice %83 {offsets = [0, 0], sizes = [16, 64], strides = [1, 1]} : vector<16x192xf32> to vector<16x64xf32>
    %85 = vector.extract_strided_slice %83 {offsets = [0, 64], sizes = [16, 64], strides = [1, 1]} : vector<16x192xf32> to vector<16x64xf32>
    %86 = vector.extract_strided_slice %83 {offsets = [0, 128], sizes = [16, 64], strides = [1, 1]} : vector<16x192xf32> to vector<16x64xf32>
    %87 = arith.extf %11 : vector<16x64xbf16> to vector<16x64xf32>
    %88 = arith.mulf %86, %87 : vector<16x64xf32>
    %cst_35 = arith.constant dense<0.000000e+00> : vector<64xf32>
    %89 = vector.multi_reduction <add>, %88, %cst_35 [0] : vector<16x64xf32> to vector<64xf32>
    %90 = vector.shape_cast %89 : vector<64xf32> to vector<1x64xf32>
    %91 = vector.broadcast %90 : vector<1x64xf32> to vector<16x64xf32>
    %92 = arith.addf %85, %91 : vector<16x64xf32>
    %cst_36 = arith.constant 0.000000e+00 : f32
    %93 = vector.broadcast %cst_36 : f32 to vector<16x64xf32>
    %94 = arith.cmpf ogt, %92, %93 : vector<16x64xf32>
    %cst_37 = arith.constant 2.000000e-01 : f32
    %95 = vector.broadcast %cst_37 : f32 to vector<16x64xf32>
    %96 = arith.mulf %95, %92 : vector<16x64xf32>
    %97 = arith.select %94, %92, %96 : vector<16x64xi1>, vector<16x64xf32>
    %98 = arith.addf %97, %6 : vector<16x64xf32>
    %cst_38 = arith.constant dense<0xFF800000> : vector<16xf32>
    %99 = vector.multi_reduction <maximumf>, %98, %cst_38 [1] : vector<16x64xf32> to vector<16xf32>
    %100 = vector.shape_cast %99 : vector<16xf32> to vector<16x1xf32>
    %101 = vector.broadcast %100 : vector<16x1xf32> to vector<16x64xf32>
    %102 = arith.subf %98, %101 : vector<16x64xf32>
    %103 = math.exp %102 : vector<16x64xf32>
    %104 = arith.truncf %103 : vector<16x64xf32> to vector<16x64xbf16>
    %cst_39 = arith.constant dense<0.000000e+00> : vector<16x64xf32>
    %105 = tpu.matmul %104, %8, %cst_39 {dimension_numbers = #tpu.dot_dimension_numbers<[1], [0], [0], [1], [0, 0, 1, 1], [], []>} : vector<16x64xbf16>, vector<64x64xbf16>, vector<16x64xf32> -> vector<16x64xf32>
    %106 = tpu.reciprocal %105 {approx = true} : vector<16x64xf32> -> vector<16x64xf32>
    %107 = arith.mulf %103, %106 : vector<16x64xf32>
    %108 = tpu.concatenate %84, %84, %84, %84 in 0 : vector<16x64xf32>, vector<16x64xf32>, vector<16x64xf32>, vector<16x64xf32> -> vector<64x64xf32>
    %109 = arith.extf %10 : vector<64x64xbf16> to vector<64x64xf32>
    %110 = arith.mulf %108, %109 : vector<64x64xf32>
    %111 = arith.truncf %110 : vector<64x64xf32> to vector<64x64xbf16>
    %112 = arith.truncf %107 : vector<16x64xf32> to vector<16x64xbf16>
    %cst_40 = arith.constant dense<0.000000e+00> : vector<16x64xf32>
    %113 = tpu.matmul %112, %111, %cst_40 {dimension_numbers = #tpu.dot_dimension_numbers<[1], [0], [0], [1], [0, 0, 1, 1], [], []>} : vector<16x64xbf16>, vector<64x64xbf16>, vector<16x64xf32> -> vector<16x64xf32>
    %114 = vector.extract_strided_slice %12 {offsets = [3, 0], sizes = [1, 64], strides = [1, 1]} : vector<9x64xf32> to vector<1x64xf32>
    %115 = vector.broadcast %114 : vector<1x64xf32> to vector<16x64xf32>
    %116 = arith.addf %113, %115 : vector<16x64xf32>
    %117 = vector.extract_strided_slice %12 {offsets = [4, 0], sizes = [1, 64], strides = [1, 1]} : vector<9x64xf32> to vector<1x64xf32>
    %118 = vector.extract_strided_slice %12 {offsets = [5, 0], sizes = [1, 64], strides = [1, 1]} : vector<9x64xf32> to vector<1x64xf32>
    %cst_41 = arith.constant dense<0.000000e+00> : vector<16xf32>
    %119 = vector.multi_reduction <add>, %116, %cst_41 [1] : vector<16x64xf32> to vector<16xf32>
    %120 = vector.shape_cast %119 : vector<16xf32> to vector<16x1xf32>
    %cst_42 = arith.constant 6.400000e+01 : f32
    %121 = vector.broadcast %cst_42 : f32 to vector<16x1xf32>
    %122 = arith.divf %120, %121 : vector<16x1xf32>
    %123 = arith.mulf %116, %116 : vector<16x64xf32>
    %cst_43 = arith.constant dense<0.000000e+00> : vector<16xf32>
    %124 = vector.multi_reduction <add>, %123, %cst_43 [1] : vector<16x64xf32> to vector<16xf32>
    %125 = vector.shape_cast %124 : vector<16xf32> to vector<16x1xf32>
    %cst_44 = arith.constant 6.400000e+01 : f32
    %126 = vector.broadcast %cst_44 : f32 to vector<16x1xf32>
    %127 = arith.divf %125, %126 : vector<16x1xf32>
    %128 = arith.mulf %122, %122 : vector<16x1xf32>
    %129 = arith.subf %127, %128 : vector<16x1xf32>
    %130 = vector.broadcast %122 : vector<16x1xf32> to vector<16x64xf32>
    %131 = arith.subf %116, %130 : vector<16x64xf32>
    %cst_45 = arith.constant 9.99999974E-6 : f32
    %132 = vector.broadcast %cst_45 : f32 to vector<16x1xf32>
    %133 = arith.addf %129, %132 : vector<16x1xf32>
    %134 = math.rsqrt %133 : vector<16x1xf32>
    %135 = vector.broadcast %134 : vector<16x1xf32> to vector<16x64xf32>
    %136 = arith.mulf %131, %135 : vector<16x64xf32>
    %137 = vector.broadcast %117 : vector<1x64xf32> to vector<16x64xf32>
    %138 = arith.mulf %136, %137 : vector<16x64xf32>
    %139 = vector.broadcast %118 : vector<1x64xf32> to vector<16x64xf32>
    %140 = arith.addf %138, %139 : vector<16x64xf32>
    %cst_46 = arith.constant 0.000000e+00 : f32
    %141 = vector.broadcast %cst_46 : f32 to vector<16x64xf32>
    %142 = arith.cmpf ogt, %140, %141 : vector<16x64xf32>
    %cst_47 = arith.constant 0.00999999977 : f32
    %143 = vector.broadcast %cst_47 : f32 to vector<16x64xf32>
    %144 = arith.mulf %143, %140 : vector<16x64xf32>
    %145 = arith.select %142, %140, %144 : vector<16x64xi1>, vector<16x64xf32>
    %c1_48 = arith.constant 1 : index
    %c0_49 = arith.constant 0 : index
    %c0_50 = arith.constant 0 : index
    %146 = vector.load %arg5[%c1_48, %c0_49, %c0_50] : memref<2x64x192xbf16, #tpu.memory_space<vmem>>, vector<1x64x192xbf16>
    %147 = vector.shape_cast %146 : vector<1x64x192xbf16> to vector<64x192xbf16>
    %148 = arith.truncf %145 : vector<16x64xf32> to vector<16x64xbf16>
    %cst_51 = arith.constant dense<0.000000e+00> : vector<16x192xf32>
    %149 = tpu.matmul %148, %147, %cst_51 {dimension_numbers = #tpu.dot_dimension_numbers<[1], [0], [0], [1], [0, 0, 1, 1], [], []>} : vector<16x64xbf16>, vector<64x192xbf16>, vector<16x192xf32> -> vector<16x192xf32>
    %150 = vector.extract_strided_slice %149 {offsets = [0, 0], sizes = [16, 64], strides = [1, 1]} : vector<16x192xf32> to vector<16x64xf32>
    %151 = vector.extract_strided_slice %149 {offsets = [0, 64], sizes = [16, 64], strides = [1, 1]} : vector<16x192xf32> to vector<16x64xf32>
    %152 = vector.extract_strided_slice %149 {offsets = [0, 128], sizes = [16, 64], strides = [1, 1]} : vector<16x192xf32> to vector<16x64xf32>
    %153 = arith.extf %11 : vector<16x64xbf16> to vector<16x64xf32>
    %154 = arith.mulf %152, %153 : vector<16x64xf32>
    %cst_52 = arith.constant dense<0.000000e+00> : vector<64xf32>
    %155 = vector.multi_reduction <add>, %154, %cst_52 [0] : vector<16x64xf32> to vector<64xf32>
    %156 = vector.shape_cast %155 : vector<64xf32> to vector<1x64xf32>
    %157 = vector.broadcast %156 : vector<1x64xf32> to vector<16x64xf32>
    %158 = arith.addf %151, %157 : vector<16x64xf32>
    %cst_53 = arith.constant 0.000000e+00 : f32
    %159 = vector.broadcast %cst_53 : f32 to vector<16x64xf32>
    %160 = arith.cmpf ogt, %158, %159 : vector<16x64xf32>
    %cst_54 = arith.constant 2.000000e-01 : f32
    %161 = vector.broadcast %cst_54 : f32 to vector<16x64xf32>
    %162 = arith.mulf %161, %158 : vector<16x64xf32>
    %163 = arith.select %160, %158, %162 : vector<16x64xi1>, vector<16x64xf32>
    %164 = arith.addf %163, %6 : vector<16x64xf32>
    %cst_55 = arith.constant dense<0xFF800000> : vector<16xf32>
    %165 = vector.multi_reduction <maximumf>, %164, %cst_55 [1] : vector<16x64xf32> to vector<16xf32>
    %166 = vector.shape_cast %165 : vector<16xf32> to vector<16x1xf32>
    %167 = vector.broadcast %166 : vector<16x1xf32> to vector<16x64xf32>
    %168 = arith.subf %164, %167 : vector<16x64xf32>
    %169 = math.exp %168 : vector<16x64xf32>
    %170 = arith.truncf %169 : vector<16x64xf32> to vector<16x64xbf16>
    %cst_56 = arith.constant dense<0.000000e+00> : vector<16x64xf32>
    %171 = tpu.matmul %170, %8, %cst_56 {dimension_numbers = #tpu.dot_dimension_numbers<[1], [0], [0], [1], [0, 0, 1, 1], [], []>} : vector<16x64xbf16>, vector<64x64xbf16>, vector<16x64xf32> -> vector<16x64xf32>
    %172 = tpu.reciprocal %171 {approx = true} : vector<16x64xf32> -> vector<16x64xf32>
    %173 = arith.mulf %169, %172 : vector<16x64xf32>
    %174 = tpu.concatenate %150, %150, %150, %150 in 0 : vector<16x64xf32>, vector<16x64xf32>, vector<16x64xf32>, vector<16x64xf32> -> vector<64x64xf32>
    %175 = arith.extf %10 : vector<64x64xbf16> to vector<64x64xf32>
    %176 = arith.mulf %174, %175 : vector<64x64xf32>
    %177 = arith.truncf %176 : vector<64x64xf32> to vector<64x64xbf16>
    %178 = arith.truncf %173 : vector<16x64xf32> to vector<16x64xbf16>
    %cst_57 = arith.constant dense<0.000000e+00> : vector<16x64xf32>
    %179 = tpu.matmul %178, %177, %cst_57 {dimension_numbers = #tpu.dot_dimension_numbers<[1], [0], [0], [1], [0, 0, 1, 1], [], []>} : vector<16x64xbf16>, vector<64x64xbf16>, vector<16x64xf32> -> vector<16x64xf32>
    %180 = vector.extract_strided_slice %12 {offsets = [6, 0], sizes = [1, 64], strides = [1, 1]} : vector<9x64xf32> to vector<1x64xf32>
    %181 = vector.broadcast %180 : vector<1x64xf32> to vector<16x64xf32>
    %182 = arith.addf %179, %181 : vector<16x64xf32>
    %183 = vector.extract_strided_slice %12 {offsets = [7, 0], sizes = [1, 64], strides = [1, 1]} : vector<9x64xf32> to vector<1x64xf32>
    %184 = vector.extract_strided_slice %12 {offsets = [8, 0], sizes = [1, 64], strides = [1, 1]} : vector<9x64xf32> to vector<1x64xf32>
    %cst_58 = arith.constant dense<0.000000e+00> : vector<16xf32>
    %185 = vector.multi_reduction <add>, %182, %cst_58 [1] : vector<16x64xf32> to vector<16xf32>
    %186 = vector.shape_cast %185 : vector<16xf32> to vector<16x1xf32>
    %cst_59 = arith.constant 6.400000e+01 : f32
    %187 = vector.broadcast %cst_59 : f32 to vector<16x1xf32>
    %188 = arith.divf %186, %187 : vector<16x1xf32>
    %189 = arith.mulf %182, %182 : vector<16x64xf32>
    %cst_60 = arith.constant dense<0.000000e+00> : vector<16xf32>
    %190 = vector.multi_reduction <add>, %189, %cst_60 [1] : vector<16x64xf32> to vector<16xf32>
    %191 = vector.shape_cast %190 : vector<16xf32> to vector<16x1xf32>
    %cst_61 = arith.constant 6.400000e+01 : f32
    %192 = vector.broadcast %cst_61 : f32 to vector<16x1xf32>
    %193 = arith.divf %191, %192 : vector<16x1xf32>
    %194 = arith.mulf %188, %188 : vector<16x1xf32>
    %195 = arith.subf %193, %194 : vector<16x1xf32>
    %196 = vector.broadcast %188 : vector<16x1xf32> to vector<16x64xf32>
    %197 = arith.subf %182, %196 : vector<16x64xf32>
    %cst_62 = arith.constant 9.99999974E-6 : f32
    %198 = vector.broadcast %cst_62 : f32 to vector<16x1xf32>
    %199 = arith.addf %195, %198 : vector<16x1xf32>
    %200 = math.rsqrt %199 : vector<16x1xf32>
    %201 = vector.broadcast %200 : vector<16x1xf32> to vector<16x64xf32>
    %202 = arith.mulf %197, %201 : vector<16x64xf32>
    %203 = vector.broadcast %183 : vector<1x64xf32> to vector<16x64xf32>
    %204 = arith.mulf %202, %203 : vector<16x64xf32>
    %205 = vector.broadcast %184 : vector<1x64xf32> to vector<16x64xf32>
    %206 = arith.addf %204, %205 : vector<16x64xf32>
    %c0_63 = arith.constant 0 : index
    %c0_64 = arith.constant 0 : index
    %c0_65 = arith.constant 0 : index
    %207 = vector.load %arg3[%c0_63, %c0_64, %c0_65] : memref<1x2x16xf32, #tpu.memory_space<vmem>>, vector<1x2x16xf32>
    %208 = vector.shape_cast %207 : vector<1x2x16xf32> to vector<2x16xf32>
    %209 = arith.truncf %208 : vector<2x16xf32> to vector<2x16xbf16>
    %210 = arith.truncf %206 : vector<16x64xf32> to vector<16x64xbf16>
    %cst_66 = arith.constant dense<0.000000e+00> : vector<2x64xf32>
    %211 = tpu.matmul %209, %210, %cst_66 {dimension_numbers = #tpu.dot_dimension_numbers<[1], [0], [0], [1], [0, 0, 1, 1], [], []>} : vector<2x16xbf16>, vector<16x64xbf16>, vector<2x64xf32> -> vector<2x64xf32>
    %212 = arith.truncf %211 : vector<2x64xf32> to vector<2x64xbf16>
    %c0_67 = arith.constant 0 : index
    %c0_68 = arith.constant 0 : index
    %213 = vector.load %arg9[%c0_67, %c0_68] : memref<448x128xbf16, #tpu.memory_space<vmem>>, vector<64x128xbf16>
    %cst_69 = arith.constant dense<0.000000e+00> : vector<2x128xf32>
    %214 = tpu.matmul %212, %213, %cst_69 {dimension_numbers = #tpu.dot_dimension_numbers<[1], [0], [0], [1], [0, 0, 1, 1], [], []>} : vector<2x64xbf16>, vector<64x128xbf16>, vector<2x128xf32> -> vector<2x128xf32>
    %c0_70 = arith.constant 0 : index
    %c0_71 = arith.constant 0 : index
    %215 = vector.load %arg10[%c0_70, %c0_71] : memref<4x128xf32, #tpu.memory_space<vmem>>, vector<1x128xf32>
    %216 = vector.broadcast %215 : vector<1x128xf32> to vector<2x128xf32>
    %217 = arith.addf %214, %216 : vector<2x128xf32>
    %218 = arith.truncf %217 : vector<2x128xf32> to vector<2x128xbf16>
    %c64 = arith.constant 64 : index
    %c0_72 = arith.constant 0 : index
    %219 = vector.load %arg9[%c64, %c0_72] : memref<448x128xbf16, #tpu.memory_space<vmem>>, vector<128x128xbf16>
    %cst_73 = arith.constant dense<0.000000e+00> : vector<2x128xf32>
    %220 = tpu.matmul %218, %219, %cst_73 {dimension_numbers = #tpu.dot_dimension_numbers<[1], [0], [0], [1], [0, 0, 1, 1], [], []>} : vector<2x128xbf16>, vector<128x128xbf16>, vector<2x128xf32> -> vector<2x128xf32>
    %c1_74 = arith.constant 1 : index
    %c0_75 = arith.constant 0 : index
    %221 = vector.load %arg10[%c1_74, %c0_75] : memref<4x128xf32, #tpu.memory_space<vmem>>, vector<1x128xf32>
    %222 = vector.broadcast %221 : vector<1x128xf32> to vector<2x128xf32>
    %223 = arith.addf %220, %222 : vector<2x128xf32>
    %224 = arith.truncf %223 : vector<2x128xf32> to vector<2x128xbf16>
    %c192 = arith.constant 192 : index
    %c0_76 = arith.constant 0 : index
    %225 = vector.load %arg9[%c192, %c0_76] : memref<448x128xbf16, #tpu.memory_space<vmem>>, vector<128x128xbf16>
    %cst_77 = arith.constant dense<0.000000e+00> : vector<2x128xf32>
    %226 = tpu.matmul %224, %225, %cst_77 {dimension_numbers = #tpu.dot_dimension_numbers<[1], [0], [0], [1], [0, 0, 1, 1], [], []>} : vector<2x128xbf16>, vector<128x128xbf16>, vector<2x128xf32> -> vector<2x128xf32>
    %c2 = arith.constant 2 : index
    %c0_78 = arith.constant 0 : index
    %227 = vector.load %arg10[%c2, %c0_78] : memref<4x128xf32, #tpu.memory_space<vmem>>, vector<1x128xf32>
    %228 = vector.broadcast %227 : vector<1x128xf32> to vector<2x128xf32>
    %229 = arith.addf %226, %228 : vector<2x128xf32>
    %cst_79 = arith.constant 0.000000e+00 : f32
    %230 = vector.broadcast %cst_79 : f32 to vector<2x128xf32>
    %231 = arith.maximumf %229, %230 : vector<2x128xf32>
    %232 = arith.truncf %231 : vector<2x128xf32> to vector<2x128xbf16>
    %c320 = arith.constant 320 : index
    %c0_80 = arith.constant 0 : index
    %233 = vector.load %arg9[%c320, %c0_80] : memref<448x128xbf16, #tpu.memory_space<vmem>>, vector<128x128xbf16>
    %cst_81 = arith.constant dense<0.000000e+00> : vector<2x128xf32>
    %234 = tpu.matmul %232, %233, %cst_81 {dimension_numbers = #tpu.dot_dimension_numbers<[1], [0], [0], [1], [0, 0, 1, 1], [], []>} : vector<2x128xbf16>, vector<128x128xbf16>, vector<2x128xf32> -> vector<2x128xf32>
    %c3 = arith.constant 3 : index
    %c0_82 = arith.constant 0 : index
    %235 = vector.load %arg10[%c3, %c0_82] : memref<4x128xf32, #tpu.memory_space<vmem>>, vector<1x128xf32>
    %236 = vector.broadcast %235 : vector<1x128xf32> to vector<2x128xf32>
    %237 = arith.addf %234, %236 : vector<2x128xf32>
    %238 = vector.extract_strided_slice %237 {offsets = [0, 0], sizes = [2, 1], strides = [1, 1]} : vector<2x128xf32> to vector<2x1xf32>
    %239 = arith.negf %238 : vector<2x1xf32>
    %240 = math.exp %239 : vector<2x1xf32>
    %cst_83 = arith.constant 1.000000e+00 : f32
    %241 = vector.broadcast %cst_83 : f32 to vector<2x1xf32>
    %242 = arith.addf %241, %240 : vector<2x1xf32>
    %243 = arith.divf %241, %242 : vector<2x1xf32>
    %c0_84 = arith.constant 0 : index
    %c0_85 = arith.constant 0 : index
    %c0_86 = arith.constant 0 : index
    %244 = vector.load %arg11[%c0_84, %c0_85, %c0_86] : memref<1x2x1xf32, #tpu.memory_space<vmem>>, vector<1x2x1xf32>
    %245 = vector.shape_cast %244 : vector<1x2x1xf32> to vector<2x1xf32>
    %246 = vector.shape_cast %243 : vector<2x1xf32> to vector<1x2x1xf32>
    tpu.vector_store %arg11[%c0_84, %c0_85, %c0_86], %246 {strides = array<i32>} : memref<1x2x1xf32, #tpu.memory_space<vmem>>, vector<1x2x1xf32>,
    return
  }
  func.func @transform_0(%arg0: i32) -> (i32, i32, i32) {
    %c0_i32 = arith.constant 0 : i32
    %c0_i32_0 = arith.constant 0 : i32
    %c0_i32_1 = arith.constant 0 : i32
    return %arg0, %c0_i32, %c0_i32_0 : i32, i32, i32
  }
  func.func @transform_1(%arg0: i32) -> (i32, i32, i32) {
    %c0_i32 = arith.constant 0 : i32
    %c0_i32_0 = arith.constant 0 : i32
    %c0_i32_1 = arith.constant 0 : i32
    return %arg0, %c0_i32, %c0_i32_0 : i32, i32, i32
  }
  func.func @transform_2(%arg0: i32) -> (i32, i32, i32) {
    %c0_i32 = arith.constant 0 : i32
    %c0_i32_0 = arith.constant 0 : i32
    %c0_i32_1 = arith.constant 0 : i32
    return %arg0, %c0_i32, %c0_i32_0 : i32, i32, i32
  }
  func.func @transform_3(%arg0: i32) -> (i32, i32) {
    %c0_i32 = arith.constant 0 : i32
    %c0_i32_0 = arith.constant 0 : i32
    %c0_i32_1 = arith.constant 0 : i32
    return %c0_i32, %c0_i32_0 : i32, i32
  }
  func.func @transform_4(%arg0: i32) -> (i32, i32, i32) {
    %c0_i32 = arith.constant 0 : i32
    %c0_i32_0 = arith.constant 0 : i32
    %c0_i32_1 = arith.constant 0 : i32
    %c0_i32_2 = arith.constant 0 : i32
    return %c0_i32, %c0_i32_0, %c0_i32_1 : i32, i32, i32
  }
  func.func @transform_5(%arg0: i32) -> (i32, i32, i32) {
    %c0_i32 = arith.constant 0 : i32
    %c0_i32_0 = arith.constant 0 : i32
    %c0_i32_1 = arith.constant 0 : i32
    %c0_i32_2 = arith.constant 0 : i32
    return %c0_i32, %c0_i32_0, %c0_i32_1 : i32, i32, i32
  }
  func.func @transform_6(%arg0: i32) -> (i32, i32) {
    %c0_i32 = arith.constant 0 : i32
    %c0_i32_0 = arith.constant 0 : i32
    %c0_i32_1 = arith.constant 0 : i32
    return %c0_i32, %c0_i32_0 : i32, i32
  }
  func.func @transform_7(%arg0: i32) -> (i32, i32) {
    %c0_i32 = arith.constant 0 : i32
    %c0_i32_0 = arith.constant 0 : i32
    %c0_i32_1 = arith.constant 0 : i32
    return %c0_i32, %c0_i32_0 : i32, i32
  }
  func.func @transform_8(%arg0: i32) -> (i32, i32) {
    %c0_i32 = arith.constant 0 : i32
    %c0_i32_0 = arith.constant 0 : i32
    %c0_i32_1 = arith.constant 0 : i32
    return %c0_i32, %c0_i32_0 : i32, i32
  }
  func.func @transform_9(%arg0: i32) -> (i32, i32) {
    %c0_i32 = arith.constant 0 : i32
    %c0_i32_0 = arith.constant 0 : i32
    %c0_i32_1 = arith.constant 0 : i32
    return %c0_i32, %c0_i32_0 : i32, i32
  }
  func.func @transform_10(%arg0: i32) -> (i32, i32, i32) {
    %c0_i32 = arith.constant 0 : i32
    %c0_i32_0 = arith.constant 0 : i32
    %c0_i32_1 = arith.constant 0 : i32
    return %arg0, %c0_i32, %c0_i32_0 : i32, i32, i32
  }
}

</mosaic_0001>

<llo_original>
// kernel: explainer_forward.1
$region0: #{explainer_forward.1}
  #allocation0 [shape = 'u32[]', space=smem, size = 0x4, offset = 0x4, fixed_abs, tag = 'smem constant byte address 0x4 - core index']
  #allocation1 [shape = 'u32[144,128]{1,0:T(1,128)}', space=vmem, size = 0x12000, scoped, tag = 'internal scratch']
  %s0 = inlined_call_operand.hbm [shape: f32[2,16,16], index: 0, kind: input, shape index: {}]
  %s1 = inlined_call_operand.hbm [shape: f32[2,16,16], index: 1, kind: input, shape index: {}]
  %s2 = inlined_call_operand.vmem [shape: f32[2,2,16], index: 2, kind: input, shape index: {}]
  %s3 = inlined_call_operand.vmem [shape: bf16[16,192], index: 3, kind: input, shape index: {}]
  %s4 = inlined_call_operand.hbm [shape: bf16[2,64,192], index: 4, kind: input, shape index: {}]
  %s5 = inlined_call_operand.hbm [shape: bf16[2,64,64], index: 5, kind: input, shape index: {}]
  %s6 = inlined_call_operand.vmem [shape: bf16[16,64], index: 6, kind: input, shape index: {}]
  %s7 = inlined_call_operand.hbm [shape: f32[9,64], index: 7, kind: input, shape index: {}]
  %s8 = inlined_call_operand.hbm [shape: bf16[448,128], index: 8, kind: input, shape index: {}]
  %s9 = inlined_call_operand.vmem [shape: f32[4,128], index: 9, kind: input, shape index: {}]
  %s10 = inlined_call_operand.vmem [shape: f32[2,2,1], index: 10, kind: output, shape index: {}]
  %s11 = sld [smem:[#allocation0]]
  $region97: #{explainer_forward.1} parent=0
    _
  %s13 = ssub.s32 1, %s11
  %s14 = scalar_select 0, %s13, %s11
  $region1: #{explainer_forward.1} parent=0
    #allocation2 [shape = 'u8[16384]{0}', space=vmem, size = 0x4000, scoped, tag = 'input window, operand 0']
    #allocation3 [shape = 's32[2]{0}', space=sflag, size = 0x8, scoped, tag = 'scoped memory for explainer_forward.1']
    #allocation4 [shape = 'u8[16384]{0}', space=vmem, size = 0x4000, scoped, tag = 'input window, operand 1']
    #allocation5 [shape = 's32[2]{0}', space=sflag, size = 0x8, scoped, tag = 'scoped memory for explainer_forward.1']
    #allocation6 [shape = 'u8[65536]{0}', space=vmem, size = 0x10000, scoped, tag = 'input window, operand 4, single buffered']
    #allocation7 [shape = 'u8[32768]{0}', space=vmem, size = 0x8000, scoped, tag = 'input window, operand 5, single buffered']
    #allocation8 [shape = 's32[1]{0}', space=sflag, size = 0x4, scoped, tag = 'scoped memory for explainer_forward.1']
    #allocation9 [shape = 'u8[8192]{0}', space=vmem, size = 0x2000, scoped, tag = 'input window, operand 7, single buffered']
    #allocation10 [shape = 'u8[114688]{0}', space=vmem, size = 0x1c000, scoped, tag = 'input window, operand 8, single buffered']
    #allocation11 [shape = 's32[1]{0}', space=sflag, size = 0x4, scoped, tag = 'scoped memory for explainer_forward.1']
    %15 = vsyncpa [#allocation3], 0
    %s16 = scalar_lea.sflag [#allocation3], 1
    %17 = vsyncpa %s16, 0
    %18 = vsyncpa [#allocation5], 0
    %s19 = scalar_lea.sflag [#allocation5], 1
    %20 = vsyncpa %s19, 0
    %21 = vsyncpa [#allocation8], 0
    %22 = vsyncpa [#allocation11], 0
    loop: start=0, step=1, limit=4
    $region2: #{explainer_forward.1} parent=1 // loop_pre_header
      _
    $region3: #{explainer_forward.1} parent=1 // loop_header
      %s24 = sphi 0, %s28
      %p25 = scmp.ge.s32.totalorder %s24, 4
      %s34 = sphi 0, %s36
      %s37 = sphi 0, %s34
      %s38 = sphi 0, %s37
      %s54 = sphi 0, %s38
      %s60 = sphi 0, %s62
      %s63 = sphi 0, %s60
      %s64 = sphi 0, %s63
      %s80 = sphi 0, %s64
      %s86 = sphi 0, %s88
      %s89 = sphi 0, %s86
      %s90 = sphi 0, %s89
      %s106 = sphi 0, %s90
      %s110 = sphi 0, %s110
      %s112 = sphi 0, %s110
      %s113 = sphi 0, %s112
      %s127 = sphi 0, %s113
      %s131 = sphi 0, %s131
      %s133 = sphi 0, %s131
      %s134 = sphi 0, %s133
      %s148 = sphi 0, %s134
      %s152 = sphi 0, %s152
      %s154 = sphi 0, %s152
      %s155 = sphi 0, %s154
      %s169 = sphi 0, %s155
      %s173 = sphi 0, %s173
      %s175 = sphi 0, %s173
      %s176 = sphi 0, %s175
      %s190 = sphi 0, %s176
      %s194 = sphi 0, %s194
      %s196 = sphi 0, %s194
      %s197 = sphi 0, %s196
      %s211 = sphi 0, %s197
      %s215 = sphi 0, %s215
      %s217 = sphi 0, %s215
      %s218 = sphi 0, %s217
      %s232 = sphi 0, %s218
      %s236 = sphi 0, %s236
      %s238 = sphi 0, %s236
      %s239 = sphi 0, %s238
      %s253 = sphi 0, %s239
      %s259 = sphi 0, %s261
      %s262 = sphi 0, %s259
      %s263 = sphi 0, %s262
      %s279 = sphi 0, %s263
    $region4: #{explainer_forward.1} parent=1 // loop_header_branch
      %27 = sbr.rel (%p25) target = $region8
    $region5: #{explainer_forward.1} parent=1 // loop_body
      %s29 = ssub.s32 %s24, 1
      %s30 = ssub.s32 %s24, 2
      %s31 = sadd.s32 %s24, 1
      %s32 = ssub.s32 %s24, %s31
      %p33 = scmp.eq.s32.totalorder %s32, 0
      %s35 = sadd.s32 %s34, 1
      %s36 = scalar_select %p33, %s34, %s35
      %p39 = pneg %p33
      %p40 = scmp.eq.s32.totalorder %s24, 1
      %p41 = por %p39, %p40
      %p42 = scmp.ne.s32.totalorder %s34, %s37
      %p43 = scmp.eq.s32.totalorder %s24, 0
      %p44 = por %p42, %p43
      %p45 = scmp.ne.s32.totalorder %s34, %s37
      %p46 = scmp.eq.s32.totalorder %s29, 1
      %p47 = por %p45, %p46
      %p48 = scmp.ne.s32.totalorder %s37, %s38
      %p49 = scmp.eq.s32.totalorder %s29, 0
      %p50 = por %p48, %p49
      %p51 = scmp.ne.s32.totalorder %s37, %s38
      %p52 = scmp.eq.s32.totalorder %s30, 1
      %p53 = por %p51, %p52
      %p55 = scmp.ne.s32.totalorder %s38, %s54
      %p56 = scmp.eq.s32.totalorder %s30, 0
      %p57 = por %p55, %p56
      %s58 = ssub.s32 %s24, %s31
      %p59 = scmp.eq.s32.totalorder %s58, 0
      %s61 = sadd.s32 %s60, 1
      %s62 = scalar_select %p59, %s60, %s61
      %p65 = pneg %p59
      %p66 = scmp.eq.s32.totalorder %s24, 1
      %p67 = por %p65, %p66
      %p68 = scmp.ne.s32.totalorder %s60, %s63
      %p69 = scmp.eq.s32.totalorder %s24, 0
      %p70 = por %p68, %p69
      %p71 = scmp.ne.s32.totalorder %s60, %s63
      %p72 = scmp.eq.s32.totalorder %s29, 1
      %p73 = por %p71, %p72
      %p74 = scmp.ne.s32.totalorder %s63, %s64
      %p75 = scmp.eq.s32.totalorder %s29, 0
      %p76 = por %p74, %p75
      %p77 = scmp.ne.s32.totalorder %s63, %s64
      %p78 = scmp.eq.s32.totalorder %s30, 1
      %p79 = por %p77, %p78
      %p81 = scmp.ne.s32.totalorder %s64, %s80
      %p82 = scmp.eq.s32.totalorder %s30, 0
      %p83 = por %p81, %p82
      %s84 = ssub.s32 %s24, %s31
      %p85 = scmp.eq.s32.totalorder %s84, 0
      %s87 = sadd.s32 %s86, 1
      %s88 = scalar_select %p85, %s86, %s87
      %p91 = pneg %p85
      %p92 = scmp.eq.s32.totalorder %s24, 1
      %p93 = por %p91, %p92
      %p94 = scmp.ne.s32.totalorder %s86, %s89
      %p95 = scmp.eq.s32.totalorder %s24, 0
      %p96 = por %p94, %p95
      %p97 = scmp.ne.s32.totalorder %s86, %s89
      %p98 = scmp.eq.s32.totalorder %s29, 1
      %p99 = por %p97, %p98
      %p100 = scmp.ne.s32.totalorder %s89, %s90
      %p101 = scmp.eq.s32.totalorder %s29, 0
      %p102 = por %p100, %p101
      %p103 = scmp.ne.s32.totalorder %s89, %s90
      %p104 = scmp.eq.s32.totalorder %s30, 1
      %p105 = por %p103, %p104
      %p107 = scmp.ne.s32.totalorder %s90, %s106
      %p108 = scmp.eq.s32.totalorder %s30, 0
      %p109 = por %p107, %p108
      %s111 = sadd.s32 %s110, 1
      %p114 = scmp.eq.s32.totalorder %s24, 1
      %p115 = scmp.ne.s32.totalorder %s110, %s112
      %p116 = scmp.eq.s32.totalorder %s24, 0
      %p117 = por %p115, %p116
      %p118 = scmp.ne.s32.totalorder %s110, %s112
      %p119 = scmp.eq.s32.totalorder %s29, 1
      %p120 = por %p118, %p119
      %p121 = scmp.ne.s32.totalorder %s112, %s113
      %p122 = scmp.eq.s32.totalorder %s29, 0
      %p123 = por %p121, %p122
      %p124 = scmp.ne.s32.totalorder %s112, %s113
      %p125 = scmp.eq.s32.totalorder %s30, 1
      %p126 = por %p124, %p125
      %p128 = scmp.ne.s32.totalorder %s113, %s127
      %p129 = scmp.eq.s32.totalorder %s30, 0
      %p130 = por %p128, %p129
      %s132 = sadd.s32 %s131, 1
      %p135 = scmp.eq.s32.totalorder %s24, 1
      %p136 = scmp.ne.s32.totalorder %s131, %s133
      %p137 = scmp.eq.s32.totalorder %s24, 0
      %p138 = por %p136, %p137
      %p139 = scmp.ne.s32.totalorder %s131, %s133
      %p140 = scmp.eq.s32.totalorder %s29, 1
      %p141 = por %p139, %p140
      %p142 = scmp.ne.s32.totalorder %s133, %s134
      %p143 = scmp.eq.s32.totalorder %s29, 0
      %p144 = por %p142, %p143
      %p145 = scmp.ne.s32.totalorder %s133, %s134
      %p146 = scmp.eq.s32.totalorder %s30, 1
      %p147 = por %p145, %p146
      %p149 = scmp.ne.s32.totalorder %s134, %s148
      %p150 = scmp.eq.s32.totalorder %s30, 0
      %p151 = por %p149, %p150
      %s153 = sadd.s32 %s152, 1
      %p156 = scmp.eq.s32.totalorder %s24, 1
      %p157 = scmp.ne.s32.totalorder %s152, %s154
      %p158 = scmp.eq.s32.totalorder %s24, 0
      %p159 = por %p157, %p158
      %p160 = scmp.ne.s32.totalorder %s152, %s154
      %p161 = scmp.eq.s32.totalorder %s29, 1
      %p162 = por %p160, %p161
      %p163 = scmp.ne.s32.totalorder %s154, %s155
      %p164 = scmp.eq.s32.totalorder %s29, 0
      %p165 = por %p163, %p164
      %p166 = scmp.ne.s32.totalorder %s154, %s155
      %p167 = scmp.eq.s32.totalorder %s30, 1
      %p168 = por %p166, %p167
      %p170 = scmp.ne.s32.totalorder %s155, %s169
      %p171 = scmp.eq.s32.totalorder %s30, 0
      %p172 = por %p170, %p171
      %s174 = sadd.s32 %s173, 1
      %p177 = scmp.eq.s32.totalorder %s24, 1
      %p178 = scmp.ne.s32.totalorder %s173, %s175
      %p179 = scmp.eq.s32.totalorder %s24, 0
      %p180 = por %p178, %p179
      %p181 = scmp.ne.s32.totalorder %s173, %s175
      %p182 = scmp.eq.s32.totalorder %s29, 1
      %p183 = por %p181, %p182
      %p184 = scmp.ne.s32.totalorder %s175, %s176
      %p185 = scmp.eq.s32.totalorder %s29, 0
      %p186 = por %p184, %p185
      %p187 = scmp.ne.s32.totalorder %s175, %s176
      %p188 = scmp.eq.s32.totalorder %s30, 1
      %p189 = por %p187, %p188
      %p191 = scmp.ne.s32.totalorder %s176, %s190
      %p192 = scmp.eq.s32.totalorder %s30, 0
      %p193 = por %p191, %p192
      %s195 = sadd.s32 %s194, 1
      %p198 = scmp.eq.s32.totalorder %s24, 1
      %p199 = scmp.ne.s32.totalorder %s194, %s196
      %p200 = scmp.eq.s32.totalorder %s24, 0
      %p201 = por %p199, %p200
      %p202 = scmp.ne.s32.totalorder %s194, %s196
      %p203 = scmp.eq.s32.totalorder %s29, 1
      %p204 = por %p202, %p203
      %p205 = scmp.ne.s32.totalorder %s196, %s197
      %p206 = scmp.eq.s32.totalorder %s29, 0
      %p207 = por %p205, %p206
      %p208 = scmp.ne.s32.totalorder %s196, %s197
      %p209 = scmp.eq.s32.totalorder %s30, 1
      %p210 = por %p208, %p209
      %p212 = scmp.ne.s32.totalorder %s197, %s211
      %p213 = scmp.eq.s32.totalorder %s30, 0
      %p214 = por %p212, %p213
      %s216 = sadd.s32 %s215, 1
      %p219 = scmp.eq.s32.totalorder %s24, 1
      %p220 = scmp.ne.s32.totalorder %s215, %s217
      %p221 = scmp.eq.s32.totalorder %s24, 0
      %p222 = por %p220, %p221
      %p223 = scmp.ne.s32.totalorder %s215, %s217
      %p224 = scmp.eq.s32.totalorder %s29, 1
      %p225 = por %p223, %p224
      %p226 = scmp.ne.s32.totalorder %s217, %s218
      %p227 = scmp.eq.s32.totalorder %s29, 0
      %p228 = por %p226, %p227
      %p229 = scmp.ne.s32.totalorder %s217, %s218
      %p230 = scmp.eq.s32.totalorder %s30, 1
      %p231 = por %p229, %p230
      %p233 = scmp.ne.s32.totalorder %s218, %s232
      %p234 = scmp.eq.s32.totalorder %s30, 0
      %p235 = por %p233, %p234
      %s237 = sadd.s32 %s236, 1
      %p240 = scmp.eq.s32.totalorder %s24, 1
      %p241 = scmp.ne.s32.totalorder %s236, %s238
      %p242 = scmp.eq.s32.totalorder %s24, 0
      %p243 = por %p241, %p242
      %p244 = scmp.ne.s32.totalorder %s236, %s238
      %p245 = scmp.eq.s32.totalorder %s29, 1
      %p246 = por %p244, %p245
      %p247 = scmp.ne.s32.totalorder %s238, %s239
      %p248 = scmp.eq.s32.totalorder %s29, 0
      %p249 = por %p247, %p248
      %p250 = scmp.ne.s32.totalorder %s238, %s239
      %p251 = scmp.eq.s32.totalorder %s30, 1
      %p252 = por %p250, %p251
      %p254 = scmp.ne.s32.totalorder %s239, %s253
      %p255 = scmp.eq.s32.totalorder %s30, 0
      %p256 = por %p254, %p255
      %s257 = ssub.s32 %s24, %s31
      %p258 = scmp.eq.s32.totalorder %s257, 0
      %s260 = sadd.s32 %s259, 1
      %s261 = scalar_select %p258, %s259, %s260
      %p264 = pneg %p258
      %p265 = scmp.eq.s32.totalorder %s24, 1
      %p266 = por %p264, %p265
      %p267 = scmp.ne.s32.totalorder %s259, %s262
      %p268 = scmp.eq.s32.totalorder %s24, 0
      %p269 = por %p267, %p268
      %p270 = scmp.ne.s32.totalorder %s259, %s262
      %p271 = scmp.eq.s32.totalorder %s29, 1
      %p272 = por %p270, %p271
      %p273 = scmp.ne.s32.totalorder %s262, %s263
      %p274 = scmp.eq.s32.totalorder %s29, 0
      %p275 = por %p273, %p274
      %p276 = scmp.ne.s32.totalorder %s262, %s263
      %p277 = scmp.eq.s32.totalorder %s30, 1
      %p278 = por %p276, %p277
      %p280 = scmp.ne.s32.totalorder %s263, %s279
      %p281 = scmp.eq.s32.totalorder %s30, 0
      %p282 = por %p280, %p281
      %p283 = scmp.le.s32.totalorder 1, %s24
      %p284 = scmp.lt.s32.totalorder %s24, 3
      %p285 = pnand %p283, %p284
      %p286 = pneg %p285
      // Predicated region
      $region9: #{explainer_forward.1} parent=5 // pred_check
        _
      $region10: #{explainer_forward.1} parent=5 // pred_check_branch
        %288 = sbr.rel (%p285) target = $region12
      $region11: #{explainer_forward.1} parent=5 // pred_region
        %s289 = ssub.s32 %s24, 1
        // Predicated region
        $region13: #{explainer_forward.1} parent=11 // pred_check
          %p290 = pneg %p123
        $region14: #{explainer_forward.1} parent=11 // pred_check_branch
          %292 = sbr.rel (%p290) target = $region16
        $region15: #{explainer_forward.1} parent=11 // pred_region
          _
        $region16: #{explainer_forward.1} parent=11 // pred_fallthru
          _
        // Predicated region
        $region17: #{explainer_forward.1} parent=11 // pred_check
          %p293 = pneg %p144
        $region18: #{explainer_forward.1} parent=11 // pred_check_branch
          %295 = sbr.rel (%p293) target = $region20
        $region19: #{explainer_forward.1} parent=11 // pred_region
          %s297 = ssub.s32 2048, 2048
          %298 = vsyncadd [#allocation5], %s297
          %s299 = sshll.u32 [#allocation6], 4
          %s300 = int_to_ptr.vmem [resolvable:$true] %s299
          %305 = dma.hbm_to_vmem [thread:$0]  %s4, 2048, %s300, [#allocation5], 128, 128, 8
        $region20: #{explainer_forward.1} parent=11 // pred_fallthru
          _
        // Predicated region
        $region21: #{explainer_forward.1} parent=11 // pred_check
          %p306 = pneg %p165
        $region22: #{explainer_forward.1} parent=11 // pred_check_branch
          %308 = sbr.rel (%p306) target = $region24
        $region23: #{explainer_forward.1} parent=11 // pred_region
          %s310 = ssub.s32 1024, 1024
          %311 = vsyncadd [#allocation8], %s310
          %s312 = sshll.u32 [#allocation7], 4
          %s313 = int_to_ptr.vmem [resolvable:$true] %s312
          %318 = dma.hbm_to_vmem [thread:$0]  %s5, 1024, %s313, [#allocation8], 64, 64, 4
        $region24: #{explainer_forward.1} parent=11 // pred_fallthru
          _
        // Predicated region
        $region25: #{explainer_forward.1} parent=11 // pred_check
          %p319 = pneg %p186
        $region26: #{explainer_forward.1} parent=11 // pred_check_branch
          %321 = sbr.rel (%p319) target = $region28
        $region27: #{explainer_forward.1} parent=11 // pred_region
          _
        $region28: #{explainer_forward.1} parent=11 // pred_fallthru
          _
        // Predicated region
        $region29: #{explainer_forward.1} parent=11 // pred_check
          %p322 = pneg %p207
        $region30: #{explainer_forward.1} parent=11 // pred_check_branch
          %324 = sbr.rel (%p322) target = $region32
        $region31: #{explainer_forward.1} parent=11 // pred_region
          %s326 = ssub.s32 256, 256
          %327 = vsyncadd [#allocation8], %s326
          %s328 = sshll.u32 [#allocation9], 4
          %s329 = int_to_ptr.vmem [resolvable:$true] %s328
          %334 = dma.hbm_to_vmem [thread:$0]  %s7, 256, %s329, [#allocation8], 128, 128, 8
        $region32: #{explainer_forward.1} parent=11 // pred_fallthru
          _
        // Predicated region
        $region33: #{explainer_forward.1} parent=11 // pred_check
          %p335 = pneg %p228
        $region34: #{explainer_forward.1} parent=11 // pred_check_branch
          %337 = sbr.rel (%p335) target = $region36
        $region35: #{explainer_forward.1} parent=11 // pred_region
          %s339 = ssub.s32 3584, 3584
          %340 = vsyncadd [#allocation11], %s339
          %s341 = sshll.u32 [#allocation10], 4
          %s342 = int_to_ptr.vmem [resolvable:$true] %s341
          %347 = dma.hbm_to_vmem [thread:$0]  %s8, 3584, %s342, [#allocation11], 64, 64, 4
        $region36: #{explainer_forward.1} parent=11 // pred_fallthru
          _
        // Predicated region
        $region37: #{explainer_forward.1} parent=11 // pred_check
          %p348 = pneg %p249
        $region38: #{explainer_forward.1} parent=11 // pred_check_branch
          %350 = sbr.rel (%p348) target = $region40
        $region39: #{explainer_forward.1} parent=11 // pred_region
          _
        $region40: #{explainer_forward.1} parent=11 // pred_fallthru
          _
      $region12: #{explainer_forward.1} parent=5 // pred_fallthru
        _
      %p351 = scmp.lt.s32.totalorder %s24, 2
      // Predicated region
      $region41: #{explainer_forward.1} parent=5 // pred_check
        %p352 = pneg %p351
      $region42: #{explainer_forward.1} parent=5 // pred_check_branch
        %354 = sbr.rel (%p352) target = $region44
      $region43: #{explainer_forward.1} parent=5 // pred_region
        // Predicated region
        $region45: #{explainer_forward.1} parent=43 // pred_check
          %p355 = pneg %p44
        $region46: #{explainer_forward.1} parent=43 // pred_check_branch
          %357 = sbr.rel (%p355) target = $region48
        $region47: #{explainer_forward.1} parent=43 // pred_region
          %s358 = sand.u32 %s34, 1
          %s359 = scalar_lea.sflag [#allocation3], %s358
          %s360 = sand.u32 %s34, 1
          %s361 = smul.addr %s360, 16
          %s362 = scalar_lea.vmem [#allocation2], %s361
          %s364 = ssub.s32 256, 256
          %365 = vsyncadd %s359, %s364
          %s366 = smul.addr %s24, 2
          %s367 = smul.addr %s366, 128
          %s368 = scalar_lea.hbm %s0, %s367
          %s369 = sshll.u32 %s362, 4
          %s370 = int_to_ptr.vmem [resolvable:$true] %s369
          %375 = dma.hbm_to_vmem [thread:$0]  %s368, 256, %s370, %s359, 128, 128, 8
        $region48: #{explainer_forward.1} parent=43 // pred_fallthru
          _
        // Predicated region
        $region49: #{explainer_forward.1} parent=43 // pred_check
          %p376 = pneg %p70
        $region50: #{explainer_forward.1} parent=43 // pred_check_branch
          %378 = sbr.rel (%p376) target = $region52
        $region51: #{explainer_forward.1} parent=43 // pred_region
          %s379 = sand.u32 %s24, 1
          %s380 = scalar_lea.sflag [#allocation5], %s379
          %s381 = sand.u32 %s60, 1
          %s382 = smul.addr %s381, 16
          %s383 = scalar_lea.vmem [#allocation4], %s382
          %s385 = ssub.s32 256, 256
          %386 = vsyncadd %s380, %s385
          %s387 = smul.addr %s24, 2
          %s388 = smul.addr %s387, 128
          %s389 = scalar_lea.hbm %s1, %s388
          %s390 = sshll.u32 %s383, 4
          %s391 = int_to_ptr.vmem [resolvable:$true] %s390
          %396 = dma.hbm_to_vmem [thread:$0]  %s389, 256, %s391, %s380, 128, 128, 8
        $region52: #{explainer_forward.1} parent=43 // pred_fallthru
          _
        // Predicated region
        $region53: #{explainer_forward.1} parent=43 // pred_check
          %p397 = pneg %p96
        $region54: #{explainer_forward.1} parent=43 // pred_check_branch
          %399 = sbr.rel (%p397) target = $region56
        $region55: #{explainer_forward.1} parent=43 // pred_region
          %p400 = scmp.lt.s32.totalorder %s24, 1
          %s401 = scalar_select %p400, %s24, 1
          %s402 = smul.addr %s401, 2
          %s403 = scalar_lea.vmem %s2, %s402
        $region56: #{explainer_forward.1} parent=43 // pred_fallthru
          _
      $region44: #{explainer_forward.1} parent=5 // pred_fallthru
        _
      %p404 = scmp.le.s32.totalorder 1, %s24
      %p405 = scmp.lt.s32.totalorder %s24, 3
      %p406 = pnand %p404, %p405
      %p407 = pneg %p406
      // Predicated region
      $region57: #{explainer_forward.1} parent=5 // pred_check
        _
      $region58: #{explainer_forward.1} parent=5 // pred_check_branch
        %409 = sbr.rel (%p406) target = $region60
      $region59: #{explainer_forward.1} parent=5 // pred_region
        %s410 = ssub.s32 %s24, 1
        %s411 = sand.u32 %s37, 1
        %s412 = scalar_lea.sflag [#allocation3], %s411
        %s413 = sand.u32 %s37, 1
        %s414 = smul.addr %s413, 16
        %s415 = scalar_lea.vmem [#allocation2], %s414
        // Predicated region
        $region61: #{explainer_forward.1} parent=59 // pred_check
          %p416 = pneg %p50
        $region62: #{explainer_forward.1} parent=59 // pred_check_branch
          %418 = sbr.rel (%p416) target = $region64
        $region63: #{explainer_forward.1} parent=59 // pred_region
          %419 = dma.done %s412, 256
        $region64: #{explainer_forward.1} parent=59 // pred_fallthru
          _
        %s420 = sand.u32 %s29, 1
        %s421 = scalar_lea.sflag [#allocation5], %s420
        %s422 = sand.u32 %s63, 1
        %s423 = smul.addr %s422, 16
        %s424 = scalar_lea.vmem [#allocation4], %s423
        // Predicated region
        $region65: #{explainer_forward.1} parent=59 // pred_check
          %p425 = pneg %p76
        $region66: #{explainer_forward.1} parent=59 // pred_check_branch
          %427 = sbr.rel (%p425) target = $region68
        $region67: #{explainer_forward.1} parent=59 // pred_region
          %428 = dma.done %s421, 256
        $region68: #{explainer_forward.1} parent=59 // pred_fallthru
          _
        // Predicated region
        $region69: #{explainer_forward.1} parent=59 // pred_check
          %p429 = pneg %p144
        $region70: #{explainer_forward.1} parent=59 // pred_check_branch
          %431 = sbr.rel (%p429) target = $region72
        $region71: #{explainer_forward.1} parent=59 // pred_region
          %432 = dma.done [#allocation5], 2048
        $region72: #{explainer_forward.1} parent=59 // pred_fallthru
          _
        // Predicated region
        $region73: #{explainer_forward.1} parent=59 // pred_check
          %p433 = pneg %p165
        $region74: #{explainer_forward.1} parent=59 // pred_check_branch
          %435 = sbr.rel (%p433) target = $region76
        $region75: #{explainer_forward.1} parent=59 // pred_region
          %436 = dma.done [#allocation8], 1024
        $region76: #{explainer_forward.1} parent=59 // pred_fallthru
          _
        // Predicated region
        $region77: #{explainer_forward.1} parent=59 // pred_check
          %p437 = pneg %p207
        $region78: #{explainer_forward.1} parent=59 // pred_check_branch
          %439 = sbr.rel (%p437) target = $region80
        $region79: #{explainer_forward.1} parent=59 // pred_region
          %440 = dma.done [#allocation8], 256
        $region80: #{explainer_forward.1} parent=59 // pred_fallthru
          _
        // Predicated region
        $region81: #{explainer_forward.1} parent=59 // pred_check
          %p441 = pneg %p228
        $region82: #{explainer_forward.1} parent=59 // pred_check_branch
          %443 = sbr.rel (%p441) target = $region84
        $region83: #{explainer_forward.1} parent=59 // pred_region
          %444 = dma.done [#allocation11], 3584
        $region84: #{explainer_forward.1} parent=59 // pred_fallthru
          _
        %s445 = sand.u32 %s37, 1
        %s446 = scalar_lea.sflag [#allocation3], %s445
        %s447 = sand.u32 %s37, 1
        %s448 = smul.addr %s447, 16
        %s449 = scalar_lea.vmem [#allocation2], %s448
        %p450 = pneg %p50
        %p451 = pneg %p47
        %s452 = sand.u32 %s29, 1
        %s453 = scalar_lea.sflag [#allocation5], %s452
        %s454 = sand.u32 %s63, 1
        %s455 = smul.addr %s454, 16
        %s456 = scalar_lea.vmem [#allocation4], %s455
        %p457 = pneg %p76
        %p458 = pneg %p73
        %p459 = scmp.lt.s32.totalorder %s29, 1
        %s460 = scalar_select %p459, %s29, 1
        %s461 = smul.addr %s460, 2
        %s462 = scalar_lea.vmem %s2, %s461
        %p463 = pneg %p102
        %p464 = pneg %p99
        %p465 = pneg %p123
        %p466 = pneg %p120
        %p467 = pneg %p144
        %p468 = pneg %p141
        %p469 = pneg %p165
        %p470 = pneg %p162
        %p471 = pneg %p186
        %p472 = pneg %p183
        %p473 = pneg %p207
        %p474 = pneg %p204
        %p475 = pneg %p228
        %p476 = pneg %p225
        %p477 = pneg %p249
        %p478 = pneg %p246
        %p479 = pneg %p275
        %p480 = pneg %p272
        %p481 = scmp.lt.s32.totalorder %s29, 1
        %s482 = scalar_select %p481, %s29, 1
        %s483 = smul.addr %s482, 2
        %s484 = scalar_lea.vmem %s10, %s483
        %p485 = scmp.lt.s32.totalorder %s29, 1
        %s486 = scalar_select %p485, %s29, 1
        %s487 = smul.addr %s486, 2
        %s488 = scalar_lea.vmem %s2, %s487
        %p489 = scmp.lt.s32.totalorder %s29, 1
        %s490 = scalar_select %p489, %s29, 1
        %s491 = smul.addr %s490, 2
        %s492 = scalar_lea.vmem %s10, %s491
        %v494 = vld [vmem:[%s424] sm:$0xff]
        %v495 = vld [vmem:[%s424 + $0x8] sm:$0xff]
        %v496 = vsub.f32 1.0, %v494
        %v497 = vsub.f32 1.0, %v495
        %v498 = vmul.f32 %v496, -1e+30
        %v499 = vmul.f32 %v497, -1e+30
        %502 = vrot.lane.b32.xlu0 %v498, 16
        %v503 = vpop.permute.xlu0 %502
        %504 = vrot.lane.b32.xlu0 %v499, 16
        %v505 = vpop.permute.xlu0 %504
        %508 = vrot.lane.b32.xlu0 %v498, 32
        %v509 = vpop.permute.xlu0 %508
        %510 = vrot.lane.b32.xlu0 %v499, 32
        %v511 = vpop.permute.xlu0 %510
        %514 = vrot.lane.b32.xlu0 %v498, 48
        %v515 = vpop.permute.xlu0 %514
        %516 = vrot.lane.b32.xlu0 %v499, 48
        %v517 = vpop.permute.xlu0 %516
        %vm520 = vcmask 130048
        %v521 = vsel %vm520, %v498, %v503
        %v522 = vsel %vm520, %v499, %v505
        %vm523 = vcmask 261120
        %v524 = vsel %vm523, %v521, %v509
        %v525 = vsel %vm523, %v522, %v511
        %vm526 = vcmask 392192
        %v527 = vsel %vm526, %v524, %v515
        %v528 = vsel %vm526, %v525, %v517
        %v529 = vld [vmem:[#allocation7] sm:$0xf]
        %v530 = vld [vmem:[#allocation7 + $0x4] sm:$0xf]
        %v531 = vld [vmem:[#allocation7 + $0x8] sm:$0xf]
        %v532 = vld [vmem:[#allocation7 + $0xc] sm:$0xf]
        %v533 = vld [vmem:[#allocation7 + $0x10] sm:$0xf]
        %v534 = vld [vmem:[#allocation7 + $0x14] sm:$0xf]
        %v535 = vld [vmem:[#allocation7 + $0x18] sm:$0xf]
        %v536 = vld [vmem:[#allocation7 + $0x1c] sm:$0xf]
        %s537 = scalar_lea.vmem [#allocation7], 32
        %v538 = vld [vmem:[%s537] sm:$0xf]
        %v539 = vld [vmem:[%s537 + $0x4] sm:$0xf]
        %v540 = vld [vmem:[%s537 + $0x8] sm:$0xf]
        %v541 = vld [vmem:[%s537 + $0xc] sm:$0xf]
        %v542 = vld [vmem:[%s537 + $0x10] sm:$0xf]
        %v543 = vld [vmem:[%s537 + $0x14] sm:$0xf]
        %v544 = vld [vmem:[%s537 + $0x18] sm:$0xf]
        %v545 = vld [vmem:[%s537 + $0x1c] sm:$0xf]
        %v546 = vld [vmem:[%s6] sm:$0xf]
        %v547 = vld [vmem:[%s6 + $0x4] sm:$0xf]
        %v548 = vld [vmem:[#allocation9] sm:$0xff]
        %v549 = vld [vmem:[#allocation9 + $0x8] sm:$0x1]
        %v550 = vld [vmem:[%s415] sm:$0xff]
        %v551 = vld [vmem:[%s415 + $0x8] sm:$0xff]
        %v552 = vld [vmem:[%s3] sm:$0xff]
        %v553 = vld [vmem:[%s3 + $0x8] sm:$0xff]
        %v554 = vpack.c.bf16 %v551, %v550
        %v557 = vunpack.c.l.b16 %v552
        %v558 = vunpack.c.h.b16 %v552
        %v559 = vunpack.c.l.b16 %v553
        %v560 = vunpack.c.h.b16 %v553
        %v561 = vpack.c.b16 %v559, %v557
        %v562 = vpack.c.b16 %v560, %v558
        %v566 = vsel %vm520, %v554, 0
        %568 = vmatprep.subr.bf16.mxu0 0
        %569 = vmatpush1.bf16.msra.mxu0 0
        %570 = vmatprep.subr.bf16.mxu0 0
        %571 = vmatpush1.bf16.msra.mxu0 0
        %572 = vmatprep.subr.bf16.mxu0 0
        %573 = vmatpush1.bf16.msra.mxu0 0
        %574 = vmatprep.subr.bf16.mxu0 0
        %575 = vmatpush1.bf16.msra.mxu0 0
        %576 = vmatprep.subr.bf16.mxu0 0
        %577 = vmatpush1.bf16.msra.mxu0 0
        %578 = vmatprep.subr.bf16.mxu0 0
        %579 = vmatpush1.bf16.msra.mxu0 0
        %580 = vmatprep.subr.bf16.mxu0 0
        %581 = vmatpush1.bf16.msra.mxu0 0
        %582 = vmatprep.subr.bf16.mxu0 %v562
        %583 = vmatpush1.bf16.msra.mxu0 %v561
        %584 = vmatprep.subr.bf16.mxu0 0
        %585 = vmatpush2.bf16.msra.mxu0 0
        %586 = vmatprep.subr.bf16.mxu0 0
        %587 = vmatpush2.bf16.msra.mxu0 0
        %588 = vmatprep.subr.bf16.mxu0 0
        %589 = vmatpush2.bf16.msra.mxu0 0
        %590 = vmatprep.subr.bf16.mxu0 0
        %591 = vmatpush2.bf16.msra.mxu0 0
        %592 = vmatprep.subr.bf16.mxu0 0
        %593 = vmatpush2.bf16.msra.mxu0 0
        %594 = vmatprep.subr.bf16.mxu0 0
        %595 = vmatpush2.bf16.msra.mxu0 0
        %596 = vmatprep.subr.bf16.mxu0 0
        %597 = vmatpush2.bf16.msra.mxu0 0
        %598 = vmatprep.subr.bf16.mxu0 0
        %599 = vmatpush2.bf16.msra.mxu0 0
        %600 = vmatprep.mubr.bf16.mxu0 0
        %601 = vmatmul.mubr.bf16.gmra.mxu0 %v566
        %v602 = vpop.f32.mrf.mxu0
        %v603 = vadd.f32 0.0, %v602
        %v604 = vpop.f32.mrf.mxu0
        %v605 = vadd.f32 0.0, %v604
        %v606 = vpop.f32.mrf.mxu0
        %v607 = vadd.f32 0.0, %v606
        %v608 = vpop.f32.mrf.mxu0
        %v609 = vadd.f32 0.0, %v608
        %610 = vdwg.mxu0
        %v611 = vunpack.c.l.bf16 %v546
        %v612 = vunpack.c.l.bf16 %v547
        %v613 = vmul.f32 %v605, %v611
        %v614 = vmul.f32 %v609, %v612
        %vm615 = vcmask 523264
        %v616 = vsel %vm615, %v613, 0.0
        %v617 = vsel %vm615, %v614, 0.0
        %v618 = vadd.f32 %v616, %v617
        %v619 = vrot.slane %v618, 4
        %v620 = vadd.f32 %v618, %v619
        %v621 = vrot.slane %v620, 2
        %v622 = vadd.f32 %v620, %v621
        %v623 = vrot.slane %v622, 1
        %v624 = vadd.f32 %v622, %v623
        %626 = vrot.lane.b32.xlu0 %v624, 64
        %v627 = vpop.permute.xlu0 %626
        %v629 = vadd.f32 %v603, %v627
        %v630 = vadd.f32 %v607, %v627
        %vm631 = vcmp.gt.f32.partialorder %v629, 0.0
        %vm632 = vcmp.gt.f32.partialorder %v630, 0.0
        %v633 = vmul.f32 %v629, 0.2
        %v634 = vmul.f32 %v630, 0.2
        %v635 = vsel %vm631, %v629, %v633
        %v636 = vsel %vm632, %v630, %v634
        %639 = vrot.lane.b32.xlu0 %v527, 64
        %v640 = vpop.permute.xlu0 %639
        %641 = vrot.lane.b32.xlu0 %v528, 64
        %v642 = vpop.permute.xlu0 %641
        %v645 = vadd.f32 %v635, %v640
        %v646 = vadd.f32 %v636, %v642
        %vm647 = vcmask 1048064
        %v648 = vsel %vm647, %v645, -inf
        %649 = vmax.xlane.f32.xlu0 %v648
        %v650 = vpop.xlane.xlu0 %649
        %v651 = vsel %vm647, %v646, -inf
        %652 = vmax.xlane.f32.xlu0 %v651
        %v653 = vpop.xlane.xlu0 %652
        %v654 = vsub.f32 %v645, %v650
        %v655 = vsub.f32 %v646, %v653
        %v656 = vmul.f32 %v654, 1.442695
        %v657 = vpow.pop %v656
        %v658 = vmul.f32 %v655, 1.442695
        %v659 = vpow.pop %v658
        %v660 = vpack.c.bf16 %v659, %v657
        %662 = vrot.lane.b32.xlu0 %v660, 64
        %v663 = vpop.permute.xlu0 %662
        %v672 = vunpack.c.l.b16 %v529
        %v673 = vunpack.c.l.b16 %v530
        %v674 = vunpack.c.l.b16 %v531
        %v675 = vunpack.c.l.b16 %v532
        %v676 = vunpack.c.l.b16 %v533
        %v677 = vunpack.c.l.b16 %v534
        %v678 = vunpack.c.l.b16 %v535
        %v679 = vunpack.c.l.b16 %v536
        %v680 = vpack.c.b16 %v673, %v672
        %v681 = vpack.c.b16 %v675, %v674
        %v682 = vpack.c.b16 %v677, %v676
        %v683 = vpack.c.b16 %v679, %v678
        %v689 = vsel %vm615, %v663, 0
        %691 = vmatprep.subr.bf16.mxu0 0
        %692 = vmatpush1.bf16.msra.mxu0 0
        %693 = vmatprep.subr.bf16.mxu0 0
        %694 = vmatpush1.bf16.msra.mxu0 0
        %695 = vmatprep.subr.bf16.mxu0 0
        %696 = vmatpush1.bf16.msra.mxu0 0
        %697 = vmatprep.subr.bf16.mxu0 0
        %698 = vmatpush1.bf16.msra.mxu0 0
        %699 = vmatprep.subr.bf16.mxu0 0
        %700 = vmatpush1.bf16.msra.mxu0 %v683
        %701 = vmatprep.subr.bf16.mxu0 0
        %702 = vmatpush1.bf16.msra.mxu0 %v682
        %703 = vmatprep.subr.bf16.mxu0 0
        %704 = vmatpush1.bf16.msra.mxu0 %v681
        %705 = vmatprep.subr.bf16.mxu0 0
        %706 = vmatpush1.bf16.msra.mxu0 %v680
        %707 = vmatprep.subr.bf16.mxu0 0
        %708 = vmatpush2.bf16.msra.mxu0 0
        %709 = vmatprep.subr.bf16.mxu0 0
        %710 = vmatpush2.bf16.msra.mxu0 0
        %711 = vmatprep.subr.bf16.mxu0 0
        %712 = vmatpush2.bf16.msra.mxu0 0
        %713 = vmatprep.subr.bf16.mxu0 0
        %714 = vmatpush2.bf16.msra.mxu0 0
        %715 = vmatprep.subr.bf16.mxu0 0
        %716 = vmatpush2.bf16.msra.mxu0 0
        %717 = vmatprep.subr.bf16.mxu0 0
        %718 = vmatpush2.bf16.msra.mxu0 0
        %719 = vmatprep.subr.bf16.mxu0 0
        %720 = vmatpush2.bf16.msra.mxu0 0
        %721 = vmatprep.subr.bf16.mxu0 0
        %722 = vmatpush2.bf16.msra.mxu0 0
        %723 = vmatprep.mubr.bf16.mxu0 0
        %724 = vmatmul.mubr.bf16.gmra.mxu0 %v689
        %v725 = vpop.f32.mrf.mxu0
        %v726 = vadd.f32 0.0, %v725
        %v727 = vpop.f32.mrf.mxu0
        %v728 = vpop.f32.mrf.mxu0
        %v729 = vadd.f32 0.0, %v728
        %v730 = vpop.f32.mrf.mxu0
        %731 = vdwg.mxu0
        %v732 = vrcp.pop %v726
        %v733 = vrcp.pop %v729
        %736 = vrot.lane.b32.xlu0 %v732, 64
        %v737 = vpop.permute.xlu0 %736
        %738 = vrot.lane.b32.xlu0 %v733, 64
        %v739 = vpop.permute.xlu0 %738
        %v742 = vmul.f32 %v657, %v737
        %v743 = vmul.f32 %v659, %v739
        %v744 = vunpack.c.l.bf16 %v538
        %v745 = vunpack.c.l.bf16 %v539
        %v746 = vunpack.c.l.bf16 %v540
        %v747 = vunpack.c.l.bf16 %v541
        %v748 = vunpack.c.l.bf16 %v542
        %v749 = vunpack.c.l.bf16 %v543
        %v750 = vunpack.c.l.bf16 %v544
        %v751 = vunpack.c.l.bf16 %v545
        %v752 = vmul.f32 %v603, %v744
        %v753 = vmul.f32 %v607, %v745
        %v754 = vmul.f32 %v603, %v746
        %v755 = vmul.f32 %v607, %v747
        %v756 = vmul.f32 %v603, %v748
        %v757 = vmul.f32 %v607, %v749
        %v758 = vmul.f32 %v603, %v750
        %v759 = vmul.f32 %v607, %v751
        %v760 = vpack.c.bf16 %v753, %v752
        %v761 = vpack.c.bf16 %v755, %v754
        %v762 = vpack.c.bf16 %v757, %v756
        %v763 = vpack.c.bf16 %v759, %v758
        %v764 = vpack.c.bf16 %v743, %v742
        %v765 = vlaneseq
        %v766 = vshrl.u32 %v765, 7
        %v767 = vsub.s32 0, %v766
        %v768 = vrot.slane %v548, %v767
        %770 = vrot.lane.b32.xlu0 %v764, 64
        %v771 = vpop.permute.xlu0 %770
        %v773 = vsel %vm615, %v771, 0
        %775 = vmatprep.subr.bf16.mxu0 0
        %776 = vmatpush1.bf16.msra.mxu0 0
        %777 = vmatprep.subr.bf16.mxu0 0
        %778 = vmatpush1.bf16.msra.mxu0 0
        %779 = vmatprep.subr.bf16.mxu0 0
        %780 = vmatpush1.bf16.msra.mxu0 0
        %781 = vmatprep.subr.bf16.mxu0 0
        %782 = vmatpush1.bf16.msra.mxu0 0
        %783 = vmatprep.subr.bf16.mxu0 0
        %784 = vmatpush1.bf16.msra.mxu0 %v763
        %785 = vmatprep.subr.bf16.mxu0 0
        %786 = vmatpush1.bf16.msra.mxu0 %v762
        %787 = vmatprep.subr.bf16.mxu0 0
        %788 = vmatpush1.bf16.msra.mxu0 %v761
        %789 = vmatprep.subr.bf16.mxu0 0
        %790 = vmatpush1.bf16.msra.mxu0 %v760
        %791 = vmatprep.subr.bf16.mxu0 0
        %792 = vmatpush2.bf16.msra.mxu0 0
        %793 = vmatprep.subr.bf16.mxu0 0
        %794 = vmatpush2.bf16.msra.mxu0 0
        %795 = vmatprep.subr.bf16.mxu0 0
        %796 = vmatpush2.bf16.msra.mxu0 0
        %797 = vmatprep.subr.bf16.mxu0 0
        %798 = vmatpush2.bf16.msra.mxu0 0
        %799 = vmatprep.subr.bf16.mxu0 0
        %800 = vmatpush2.bf16.msra.mxu0 0
        %801 = vmatprep.subr.bf16.mxu0 0
        %802 = vmatpush2.bf16.msra.mxu0 0
        %803 = vmatprep.subr.bf16.mxu0 0
        %804 = vmatpush2.bf16.msra.mxu0 0
        %805 = vmatprep.subr.bf16.mxu0 0
        %806 = vmatpush2.bf16.msra.mxu0 0
        %807 = vmatprep.mubr.bf16.mxu0 0
        %808 = vmatmul.mubr.bf16.gmra.mxu0 %v773
        %v809 = vpop.f32.mrf.mxu0
        %v810 = vadd.f32 %v768, %v809
        %v811 = vpop.f32.mrf.mxu0
        %v812 = vpop.f32.mrf.mxu0
        %v813 = vadd.f32 %v768, %v812
        %v814 = vpop.f32.mrf.mxu0
        %815 = vdwg.mxu0
        %v816 = vsel %vm615, %v810, 0.0
        %817 = vadd.xlane.f32.xlu0 %v816
        %v818 = vpop.xlane.xlu0 %817
        %v819 = vsel %vm615, %v813, 0.0
        %820 = vadd.xlane.f32.xlu0 %v819
        %v821 = vpop.xlane.xlu0 %820
        %v822 = vrcp.pop 64.0
        %v823 = vmul.f32 %v818, %v822
        %v824 = vmul.f32 %v821, %v822
        %v825 = vmul.f32 %v810, %v810
        %v826 = vmul.f32 %v813, %v813
        %v827 = vsel %vm615, %v825, 0.0
        %828 = vadd.xlane.f32.xlu0 %v827
        %v829 = vpop.xlane.xlu0 %828
        %v830 = vsel %vm615, %v826, 0.0
        %831 = vadd.xlane.f32.xlu0 %v830
        %v832 = vpop.xlane.xlu0 %831
        %v833 = vmul.f32 %v829, %v822
        %v834 = vmul.f32 %v832, %v822
        %v835 = vmul.f32 %v823, %v823
        %v836 = vmul.f32 %v824, %v824
        %v837 = vsub.f32 %v833, %v835
        %v838 = vsub.f32 %v834, %v836
        %v839 = vsub.f32 %v810, %v823
        %v840 = vsub.f32 %v813, %v824
        %v841 = vadd.f32 %v837, 1e-05
        %v842 = vadd.f32 %v838, 1e-05
        %v843 = vrsqrt.pop %v841
        %v844 = vrsqrt.pop %v842
        %v845 = vmul.f32 %v839, %v843
        %v846 = vmul.f32 %v840, %v844
        %v847 = vlaneseq
        %v848 = vshrl.u32 %v847, 7
        %v849 = vsub.s32 1, %v848
        %v850 = vrot.slane %v548, %v849
        %v851 = vmul.f32 %v845, %v850
        %v852 = vmul.f32 %v846, %v850
        %v853 = vlaneseq
        %v854 = vshrl.u32 %v853, 7
        %v855 = vsub.s32 2, %v854
        %v856 = vrot.slane %v548, %v855
        %v857 = vadd.f32 %v851, %v856
        %v858 = vadd.f32 %v852, %v856
        %vm859 = vcmp.gt.f32.partialorder %v857, 0.0
        %vm860 = vcmp.gt.f32.partialorder %v858, 0.0
        %v861 = vmul.f32 %v857, 0.01
        %v862 = vmul.f32 %v858, 0.01
        %v863 = vsel %vm859, %v857, %v861
        %v864 = vsel %vm860, %v858, %v862
        %v865 = vld [vmem:[#allocation6] sm:$0xff]
        %v866 = vld [vmem:[#allocation6 + $0x8] sm:$0xff]
        %v867 = vld [vmem:[#allocation6 + $0x10] sm:$0xff]
        %v868 = vld [vmem:[#allocation6 + $0x18] sm:$0xff]
        %v869 = vld [vmem:[#allocation6 + $0x20] sm:$0xff]
        %v870 = vld [vmem:[#allocation6 + $0x28] sm:$0xff]
        %v871 = vld [vmem:[#allocation6 + $0x30] sm:$0xff]
        %v872 = vld [vmem:[#allocation6 + $0x38] sm:$0xff]
        %v873 = vpack.c.bf16 %v864, %v863
        %v882 = vunpack.c.l.b16 %v865
        %v883 = vunpack.c.h.b16 %v865
        %v884 = vunpack.c.l.b16 %v866
        %v885 = vunpack.c.h.b16 %v866
        %v886 = vunpack.c.l.b16 %v867
        %v887 = vunpack.c.h.b16 %v867
        %v888 = vunpack.c.l.b16 %v868
        %v889 = vunpack.c.h.b16 %v868
        %v890 = vunpack.c.l.b16 %v869
        %v891 = vunpack.c.h.b16 %v869
        %v892 = vunpack.c.l.b16 %v870
        %v893 = vunpack.c.h.b16 %v870
        %v894 = vunpack.c.l.b16 %v871
        %v895 = vunpack.c.h.b16 %v871
        %v896 = vunpack.c.l.b16 %v872
        %v897 = vunpack.c.h.b16 %v872
        %v898 = vpack.c.b16 %v884, %v882
        %v899 = vpack.c.b16 %v885, %v883
        %v900 = vpack.c.b16 %v888, %v886
        %v901 = vpack.c.b16 %v889, %v887
        %v902 = vpack.c.b16 %v892, %v890
        %v903 = vpack.c.b16 %v893, %v891
        %v904 = vpack.c.b16 %v896, %v894
        %v905 = vpack.c.b16 %v897, %v895
        %v915 = vsel %vm615, %v873, 0
        %917 = vmatprep.subr.bf16.mxu0 0
        %918 = vmatpush1.bf16.msra.mxu0 0
        %919 = vmatprep.subr.bf16.mxu0 0
        %920 = vmatpush1.bf16.msra.mxu0 0
        %921 = vmatprep.subr.bf16.mxu0 0
        %922 = vmatpush1.bf16.msra.mxu0 0
        %923 = vmatprep.subr.bf16.mxu0 0
        %924 = vmatpush1.bf16.msra.mxu0 0
        %925 = vmatprep.subr.bf16.mxu0 %v905
        %926 = vmatpush1.bf16.msra.mxu0 %v904
        %927 = vmatprep.subr.bf16.mxu0 %v903
        %928 = vmatpush1.bf16.msra.mxu0 %v902
        %929 = vmatprep.subr.bf16.mxu0 %v901
        %930 = vmatpush1.bf16.msra.mxu0 %v900
        %931 = vmatprep.subr.bf16.mxu0 %v899
        %932 = vmatpush1.bf16.msra.mxu0 %v898
        %933 = vmatprep.subr.bf16.mxu0 0
        %934 = vmatpush2.bf16.msra.mxu0 0
        %935 = vmatprep.subr.bf16.mxu0 0
        %936 = vmatpush2.bf16.msra.mxu0 0
        %937 = vmatprep.subr.bf16.mxu0 0
        %938 = vmatpush2.bf16.msra.mxu0 0
        %939 = vmatprep.subr.bf16.mxu0 0
        %940 = vmatpush2.bf16.msra.mxu0 0
        %941 = vmatprep.subr.bf16.mxu0 0
        %942 = vmatpush2.bf16.msra.mxu0 0
        %943 = vmatprep.subr.bf16.mxu0 0
        %944 = vmatpush2.bf16.msra.mxu0 0
        %945 = vmatprep.subr.bf16.mxu0 0
        %946 = vmatpush2.bf16.msra.mxu0 0
        %947 = vmatprep.subr.bf16.mxu0 0
        %948 = vmatpush2.bf16.msra.mxu0 0
        %949 = vmatprep.mubr.bf16.mxu0 0
        %950 = vmatmul.mubr.bf16.gmra.mxu0 %v915
        %v951 = vpop.f32.mrf.mxu0
        %v952 = vadd.f32 0.0, %v951
        %v953 = vpop.f32.mrf.mxu0
        %v954 = vadd.f32 0.0, %v953
        %v955 = vpop.f32.mrf.mxu0
        %v956 = vadd.f32 0.0, %v955
        %v957 = vpop.f32.mrf.mxu0
        %v958 = vadd.f32 0.0, %v957
        %959 = vdwg.mxu0
        %v960 = vmul.f32 %v954, %v611
        %v961 = vmul.f32 %v958, %v612
        %v962 = vsel %vm615, %v960, 0.0
        %v963 = vsel %vm615, %v961, 0.0
        %v964 = vadd.f32 %v962, %v963
        %v965 = vrot.slane %v964, 4
        %v966 = vadd.f32 %v964, %v965
        %v967 = vrot.slane %v966, 2
        %v968 = vadd.f32 %v966, %v967
        %v969 = vrot.slane %v968, 1
        %v970 = vadd.f32 %v968, %v969
        %972 = vrot.lane.b32.xlu0 %v970, 64
        %v973 = vpop.permute.xlu0 %972
        %v975 = vadd.f32 %v952, %v973
        %v976 = vadd.f32 %v956, %v973
        %vm977 = vcmp.gt.f32.partialorder %v975, 0.0
        %vm978 = vcmp.gt.f32.partialorder %v976, 0.0
        %v979 = vmul.f32 %v975, 0.2
        %v980 = vmul.f32 %v976, 0.2
        %v981 = vsel %vm977, %v975, %v979
        %v982 = vsel %vm978, %v976, %v980
        %v983 = vadd.f32 %v981, %v640
        %v984 = vadd.f32 %v982, %v642
        %v985 = vsel %vm647, %v983, -inf
        %986 = vmax.xlane.f32.xlu0 %v985
        %v987 = vpop.xlane.xlu0 %986
        %v988 = vsel %vm647, %v984, -inf
        %989 = vmax.xlane.f32.xlu0 %v988
        %v990 = vpop.xlane.xlu0 %989
        %v991 = vsub.f32 %v983, %v987
        %v992 = vsub.f32 %v984, %v990
        %v993 = vmul.f32 %v991, 1.442695
        %v994 = vpow.pop %v993
        %v995 = vmul.f32 %v992, 1.442695
        %v996 = vpow.pop %v995
        %v997 = vpack.c.bf16 %v996, %v994
        %999 = vrot.lane.b32.xlu0 %v997, 64
        %v1000 = vpop.permute.xlu0 %999
        %v1002 = vsel %vm615, %v1000, 0
        %1004 = vmatprep.subr.bf16.mxu0 0
        %1005 = vmatpush1.bf16.msra.mxu0 0
        %1006 = vmatprep.subr.bf16.mxu0 0
        %1007 = vmatpush1.bf16.msra.mxu0 0
        %1008 = vmatprep.subr.bf16.mxu0 0
        %1009 = vmatpush1.bf16.msra.mxu0 0
        %1010 = vmatprep.subr.bf16.mxu0 0
        %1011 = vmatpush1.bf16.msra.mxu0 0
        %1012 = vmatprep.subr.bf16.mxu0 0
        %1013 = vmatpush1.bf16.msra.mxu0 %v683
        %1014 = vmatprep.subr.bf16.mxu0 0
        %1015 = vmatpush1.bf16.msra.mxu0 %v682
        %1016 = vmatprep.subr.bf16.mxu0 0
        %1017 = vmatpush1.bf16.msra.mxu0 %v681
        %1018 = vmatprep.subr.bf16.mxu0 0
        %1019 = vmatpush1.bf16.msra.mxu0 %v680
        %1020 = vmatprep.subr.bf16.mxu0 0
        %1021 = vmatpush2.bf16.msra.mxu0 0
        %1022 = vmatprep.subr.bf16.mxu0 0
        %1023 = vmatpush2.bf16.msra.mxu0 0
        %1024 = vmatprep.subr.bf16.mxu0 0
        %1025 = vmatpush2.bf16.msra.mxu0 0
        %1026 = vmatprep.subr.bf16.mxu0 0
        %1027 = vmatpush2.bf16.msra.mxu0 0
        %1028 = vmatprep.subr.bf16.mxu0 0
        %1029 = vmatpush2.bf16.msra.mxu0 0
        %1030 = vmatprep.subr.bf16.mxu0 0
        %1031 = vmatpush2.bf16.msra.mxu0 0
        %1032 = vmatprep.subr.bf16.mxu0 0
        %1033 = vmatpush2.bf16.msra.mxu0 0
        %1034 = vmatprep.subr.bf16.mxu0 0
        %1035 = vmatpush2.bf16.msra.mxu0 0
        %1036 = vmatprep.mubr.bf16.mxu0 0
        %1037 = vmatmul.mubr.bf16.gmra.mxu0 %v1002
        %v1038 = vpop.f32.mrf.mxu0
        %v1039 = vadd.f32 0.0, %v1038
        %v1040 = vpop.f32.mrf.mxu0
        %v1041 = vpop.f32.mrf.mxu0
        %v1042 = vadd.f32 0.0, %v1041
        %v1043 = vpop.f32.mrf.mxu0
        %1044 = vdwg.mxu0
        %v1045 = vrcp.pop %v1039
        %v1046 = vrcp.pop %v1042
        %1049 = vrot.lane.b32.xlu0 %v1045, 64
        %v1050 = vpop.permute.xlu0 %1049
        %1051 = vrot.lane.b32.xlu0 %v1046, 64
        %v1052 = vpop.permute.xlu0 %1051
        %v1055 = vmul.f32 %v994, %v1050
        %v1056 = vmul.f32 %v996, %v1052
        %v1057 = vmul.f32 %v952, %v744
        %v1058 = vmul.f32 %v956, %v745
        %v1059 = vmul.f32 %v952, %v746
        %v1060 = vmul.f32 %v956, %v747
        %v1061 = vmul.f32 %v952, %v748
        %v1062 = vmul.f32 %v956, %v749
        %v1063 = vmul.f32 %v952, %v750
        %v1064 = vmul.f32 %v956, %v751
        %v1065 = vpack.c.bf16 %v1058, %v1057
        %v1066 = vpack.c.bf16 %v1060, %v1059
        %v1067 = vpack.c.bf16 %v1062, %v1061
        %v1068 = vpack.c.bf16 %v1064, %v1063
        %v1069 = vpack.c.bf16 %v1056, %v1055
        %v1070 = vlaneseq
        %v1071 = vshrl.u32 %v1070, 7
        %v1072 = vsub.s32 3, %v1071
        %v1073 = vrot.slane %v548, %v1072
        %1075 = vrot.lane.b32.xlu0 %v1069, 64
        %v1076 = vpop.permute.xlu0 %1075
        %v1078 = vsel %vm615, %v1076, 0
        %1080 = vmatprep.subr.bf16.mxu0 0
        %1081 = vmatpush1.bf16.msra.mxu0 0
        %1082 = vmatprep.subr.bf16.mxu0 0
        %1083 = vmatpush1.bf16.msra.mxu0 0
        %1084 = vmatprep.subr.bf16.mxu0 0
        %1085 = vmatpush1.bf16.msra.mxu0 0
        %1086 = vmatprep.subr.bf16.mxu0 0
        %1087 = vmatpush1.bf16.msra.mxu0 0
        %1088 = vmatprep.subr.bf16.mxu0 0
        %1089 = vmatpush1.bf16.msra.mxu0 %v1068
        %1090 = vmatprep.subr.bf16.mxu0 0
        %1091 = vmatpush1.bf16.msra.mxu0 %v1067
        %1092 = vmatprep.subr.bf16.mxu0 0
        %1093 = vmatpush1.bf16.msra.mxu0 %v1066
        %1094 = vmatprep.subr.bf16.mxu0 0
        %1095 = vmatpush1.bf16.msra.mxu0 %v1065
        %1096 = vmatprep.subr.bf16.mxu0 0
        %1097 = vmatpush2.bf16.msra.mxu0 0
        %1098 = vmatprep.subr.bf16.mxu0 0
        %1099 = vmatpush2.bf16.msra.mxu0 0
        %1100 = vmatprep.subr.bf16.mxu0 0
        %1101 = vmatpush2.bf16.msra.mxu0 0
        %1102 = vmatprep.subr.bf16.mxu0 0
        %1103 = vmatpush2.bf16.msra.mxu0 0
        %1104 = vmatprep.subr.bf16.mxu0 0
        %1105 = vmatpush2.bf16.msra.mxu0 0
        %1106 = vmatprep.subr.bf16.mxu0 0
        %1107 = vmatpush2.bf16.msra.mxu0 0
        %1108 = vmatprep.subr.bf16.mxu0 0
        %1109 = vmatpush2.bf16.msra.mxu0 0
        %1110 = vmatprep.subr.bf16.mxu0 0
        %1111 = vmatpush2.bf16.msra.mxu0 0
        %1112 = vmatprep.mubr.bf16.mxu0 0
        %1113 = vmatmul.mubr.bf16.gmra.mxu0 %v1078
        %v1114 = vpop.f32.mrf.mxu0
        %v1115 = vadd.f32 %v1073, %v1114
        %v1116 = vpop.f32.mrf.mxu0
        %v1117 = vpop.f32.mrf.mxu0
        %v1118 = vadd.f32 %v1073, %v1117
        %v1119 = vpop.f32.mrf.mxu0
        %1120 = vdwg.mxu0
        %v1121 = vsel %vm615, %v1115, 0.0
        %1122 = vadd.xlane.f32.xlu0 %v1121
        %v1123 = vpop.xlane.xlu0 %1122
        %v1124 = vsel %vm615, %v1118, 0.0
        %1125 = vadd.xlane.f32.xlu0 %v1124
        %v1126 = vpop.xlane.xlu0 %1125
        %v1127 = vmul.f32 %v1123, %v822
        %v1128 = vmul.f32 %v1126, %v822
        %v1129 = vmul.f32 %v1115, %v1115
        %v1130 = vmul.f32 %v1118, %v1118
        %v1131 = vsel %vm615, %v1129, 0.0
        %1132 = vadd.xlane.f32.xlu0 %v1131
        %v1133 = vpop.xlane.xlu0 %1132
        %v1134 = vsel %vm615, %v1130, 0.0
        %1135 = vadd.xlane.f32.xlu0 %v1134
        %v1136 = vpop.xlane.xlu0 %1135
        %v1137 = vmul.f32 %v1133, %v822
        %v1138 = vmul.f32 %v1136, %v822
        %v1139 = vmul.f32 %v1127, %v1127
        %v1140 = vmul.f32 %v1128, %v1128
        %v1141 = vsub.f32 %v1137, %v1139
        %v1142 = vsub.f32 %v1138, %v1140
        %v1143 = vsub.f32 %v1115, %v1127
        %v1144 = vsub.f32 %v1118, %v1128
        %v1145 = vadd.f32 %v1141, 1e-05
        %v1146 = vadd.f32 %v1142, 1e-05
        %v1147 = vrsqrt.pop %v1145
        %v1148 = vrsqrt.pop %v1146
        %v1149 = vmul.f32 %v1143, %v1147
        %v1150 = vmul.f32 %v1144, %v1148
        %v1151 = vlaneseq
        %v1152 = vshrl.u32 %v1151, 7
        %v1153 = vsub.s32 4, %v1152
        %v1154 = vrot.slane %v548, %v1153
        %v1155 = vmul.f32 %v1149, %v1154
        %v1156 = vmul.f32 %v1150, %v1154
        %v1157 = vlaneseq
        %v1158 = vshrl.u32 %v1157, 7
        %v1159 = vsub.s32 5, %v1158
        %v1160 = vrot.slane %v548, %v1159
        %v1161 = vadd.f32 %v1155, %v1160
        %v1162 = vadd.f32 %v1156, %v1160
        %vm1163 = vcmp.gt.f32.partialorder %v1161, 0.0
        %vm1164 = vcmp.gt.f32.partialorder %v1162, 0.0
        %v1165 = vmul.f32 %v1161, 0.01
        %v1166 = vmul.f32 %v1162, 0.01
        %v1167 = vsel %vm1163, %v1161, %v1165
        %v1168 = vsel %vm1164, %v1162, %v1166
        %s1169 = scalar_lea.vmem [#allocation6], 64
        %v1170 = vld [vmem:[%s1169] sm:$0xff]
        %v1171 = vld [vmem:[%s1169 + $0x8] sm:$0xff]
        %v1172 = vld [vmem:[%s1169 + $0x10] sm:$0xff]
        %v1173 = vld [vmem:[%s1169 + $0x18] sm:$0xff]
        %v1174 = vld [vmem:[%s1169 + $0x20] sm:$0xff]
        %v1175 = vld [vmem:[%s1169 + $0x28] sm:$0xff]
        %v1176 = vld [vmem:[%s1169 + $0x30] sm:$0xff]
        %v1177 = vld [vmem:[%s1169 + $0x38] sm:$0xff]
        %v1178 = vpack.c.bf16 %v1168, %v1167
        %v1187 = vunpack.c.l.b16 %v1170
        %v1188 = vunpack.c.h.b16 %v1170
        %v1189 = vunpack.c.l.b16 %v1171
        %v1190 = vunpack.c.h.b16 %v1171
        %v1191 = vunpack.c.l.b16 %v1172
        %v1192 = vunpack.c.h.b16 %v1172
        %v1193 = vunpack.c.l.b16 %v1173
        %v1194 = vunpack.c.h.b16 %v1173
        %v1195 = vunpack.c.l.b16 %v1174
        %v1196 = vunpack.c.h.b16 %v1174
        %v1197 = vunpack.c.l.b16 %v1175
        %v1198 = vunpack.c.h.b16 %v1175
        %v1199 = vunpack.c.l.b16 %v1176
        %v1200 = vunpack.c.h.b16 %v1176
        %v1201 = vunpack.c.l.b16 %v1177
        %v1202 = vunpack.c.h.b16 %v1177
        %v1203 = vpack.c.b16 %v1189, %v1187
        %v1204 = vpack.c.b16 %v1190, %v1188
        %v1205 = vpack.c.b16 %v1193, %v1191
        %v1206 = vpack.c.b16 %v1194, %v1192
        %v1207 = vpack.c.b16 %v1197, %v1195
        %v1208 = vpack.c.b16 %v1198, %v1196
        %v1209 = vpack.c.b16 %v1201, %v1199
        %v1210 = vpack.c.b16 %v1202, %v1200
        %v1220 = vsel %vm615, %v1178, 0
        %1222 = vmatprep.subr.bf16.mxu0 0
        %1223 = vmatpush1.bf16.msra.mxu0 0
        %1224 = vmatprep.subr.bf16.mxu0 0
        %1225 = vmatpush1.bf16.msra.mxu0 0
        %1226 = vmatprep.subr.bf16.mxu0 0
        %1227 = vmatpush1.bf16.msra.mxu0 0
        %1228 = vmatprep.subr.bf16.mxu0 0
        %1229 = vmatpush1.bf16.msra.mxu0 0
        %1230 = vmatprep.subr.bf16.mxu0 %v1210
        %1231 = vmatpush1.bf16.msra.mxu0 %v1209
        %1232 = vmatprep.subr.bf16.mxu0 %v1208
        %1233 = vmatpush1.bf16.msra.mxu0 %v1207
        %1234 = vmatprep.subr.bf16.mxu0 %v1206
        %1235 = vmatpush1.bf16.msra.mxu0 %v1205
        %1236 = vmatprep.subr.bf16.mxu0 %v1204
        %1237 = vmatpush1.bf16.msra.mxu0 %v1203
        %1238 = vmatprep.subr.bf16.mxu0 0
        %1239 = vmatpush2.bf16.msra.mxu0 0
        %1240 = vmatprep.subr.bf16.mxu0 0
        %1241 = vmatpush2.bf16.msra.mxu0 0
        %1242 = vmatprep.subr.bf16.mxu0 0
        %1243 = vmatpush2.bf16.msra.mxu0 0
        %1244 = vmatprep.subr.bf16.mxu0 0
        %1245 = vmatpush2.bf16.msra.mxu0 0
        %1246 = vmatprep.subr.bf16.mxu0 0
        %1247 = vmatpush2.bf16.msra.mxu0 0
        %1248 = vmatprep.subr.bf16.mxu0 0
        %1249 = vmatpush2.bf16.msra.mxu0 0
        %1250 = vmatprep.subr.bf16.mxu0 0
        %1251 = vmatpush2.bf16.msra.mxu0 0
        %1252 = vmatprep.subr.bf16.mxu0 0
        %1253 = vmatpush2.bf16.msra.mxu0 0
        %1254 = vmatprep.mubr.bf16.mxu0 0
        %1255 = vmatmul.mubr.bf16.gmra.mxu0 %v1220
        %v1256 = vpop.f32.mrf.mxu0
        %v1257 = vadd.f32 0.0, %v1256
        %v1258 = vpop.f32.mrf.mxu0
        %v1259 = vadd.f32 0.0, %v1258
        %v1260 = vpop.f32.mrf.mxu0
        %v1261 = vadd.f32 0.0, %v1260
        %v1262 = vpop.f32.mrf.mxu0
        %v1263 = vadd.f32 0.0, %v1262
        %1264 = vdwg.mxu0
        %v1265 = vmul.f32 %v1259, %v611
        %v1266 = vmul.f32 %v1263, %v612
        %v1267 = vsel %vm615, %v1265, 0.0
        %v1268 = vsel %vm615, %v1266, 0.0
        %v1269 = vadd.f32 %v1267, %v1268
        %v1270 = vrot.slane %v1269, 4
        %v1271 = vadd.f32 %v1269, %v1270
        %v1272 = vrot.slane %v1271, 2
        %v1273 = vadd.f32 %v1271, %v1272
        %v1274 = vrot.slane %v1273, 1
        %v1275 = vadd.f32 %v1273, %v1274
        %1277 = vrot.lane.b32.xlu0 %v1275, 64
        %v1278 = vpop.permute.xlu0 %1277
        %v1280 = vadd.f32 %v1257, %v1278
        %v1281 = vadd.f32 %v1261, %v1278
        %vm1282 = vcmp.gt.f32.partialorder %v1280, 0.0
        %vm1283 = vcmp.gt.f32.partialorder %v1281, 0.0
        %v1284 = vmul.f32 %v1280, 0.2
        %v1285 = vmul.f32 %v1281, 0.2
        %v1286 = vsel %vm1282, %v1280, %v1284
        %v1287 = vsel %vm1283, %v1281, %v1285
        %v1288 = vadd.f32 %v1286, %v640
        %v1289 = vadd.f32 %v1287, %v642
        %v1290 = vsel %vm647, %v1288, -inf
        %1291 = vmax.xlane.f32.xlu0 %v1290
        %v1292 = vpop.xlane.xlu0 %1291
        %v1293 = vsel %vm647, %v1289, -inf
        %1294 = vmax.xlane.f32.xlu0 %v1293
        %v1295 = vpop.xlane.xlu0 %1294
        %v1296 = vsub.f32 %v1288, %v1292
        %v1297 = vsub.f32 %v1289, %v1295
        %v1298 = vmul.f32 %v1296, 1.442695
        %v1299 = vpow.pop %v1298
        %v1300 = vmul.f32 %v1297, 1.442695
        %v1301 = vpow.pop %v1300
        %v1302 = vpack.c.bf16 %v1301, %v1299
        %1304 = vrot.lane.b32.xlu0 %v1302, 64
        %v1305 = vpop.permute.xlu0 %1304
        %v1307 = vsel %vm615, %v1305, 0
        %1309 = vmatprep.subr.bf16.mxu0 0
        %1310 = vmatpush1.bf16.msra.mxu0 0
        %1311 = vmatprep.subr.bf16.mxu0 0
        %1312 = vmatpush1.bf16.msra.mxu0 0
        %1313 = vmatprep.subr.bf16.mxu0 0
        %1314 = vmatpush1.bf16.msra.mxu0 0
        %1315 = vmatprep.subr.bf16.mxu0 0
        %1316 = vmatpush1.bf16.msra.mxu0 0
        %1317 = vmatprep.subr.bf16.mxu0 0
        %1318 = vmatpush1.bf16.msra.mxu0 %v683
        %1319 = vmatprep.subr.bf16.mxu0 0
        %1320 = vmatpush1.bf16.msra.mxu0 %v682
        %1321 = vmatprep.subr.bf16.mxu0 0
        %1322 = vmatpush1.bf16.msra.mxu0 %v681
        %1323 = vmatprep.subr.bf16.mxu0 0
        %1324 = vmatpush1.bf16.msra.mxu0 %v680
        %1325 = vmatprep.subr.bf16.mxu0 0
        %1326 = vmatpush2.bf16.msra.mxu0 0
        %1327 = vmatprep.subr.bf16.mxu0 0
        %1328 = vmatpush2.bf16.msra.mxu0 0
        %1329 = vmatprep.subr.bf16.mxu0 0
        %1330 = vmatpush2.bf16.msra.mxu0 0
        %1331 = vmatprep.subr.bf16.mxu0 0
        %1332 = vmatpush2.bf16.msra.mxu0 0
        %1333 = vmatprep.subr.bf16.mxu0 0
        %1334 = vmatpush2.bf16.msra.mxu0 0
        %1335 = vmatprep.subr.bf16.mxu0 0
        %1336 = vmatpush2.bf16.msra.mxu0 0
        %1337 = vmatprep.subr.bf16.mxu0 0
        %1338 = vmatpush2.bf16.msra.mxu0 0
        %1339 = vmatprep.subr.bf16.mxu0 0
        %1340 = vmatpush2.bf16.msra.mxu0 0
        %1341 = vmatprep.mubr.bf16.mxu0 0
        %1342 = vmatmul.mubr.bf16.gmra.mxu0 %v1307
        %v1343 = vpop.f32.mrf.mxu0
        %v1344 = vadd.f32 0.0, %v1343
        %v1345 = vpop.f32.mrf.mxu0
        %v1346 = vpop.f32.mrf.mxu0
        %v1347 = vadd.f32 0.0, %v1346
        %v1348 = vpop.f32.mrf.mxu0
        %1349 = vdwg.mxu0
        %v1350 = vrcp.pop %v1344
        %v1351 = vrcp.pop %v1347
        %1354 = vrot.lane.b32.xlu0 %v1350, 64
        %v1355 = vpop.permute.xlu0 %1354
        %1356 = vrot.lane.b32.xlu0 %v1351, 64
        %v1357 = vpop.permute.xlu0 %1356
        %v1360 = vmul.f32 %v1299, %v1355
        %v1361 = vmul.f32 %v1301, %v1357
        %v1362 = vmul.f32 %v1257, %v744
        %v1363 = vmul.f32 %v1261, %v745
        %v1364 = vmul.f32 %v1257, %v746
        %v1365 = vmul.f32 %v1261, %v747
        %v1366 = vmul.f32 %v1257, %v748
        %v1367 = vmul.f32 %v1261, %v749
        %v1368 = vmul.f32 %v1257, %v750
        %v1369 = vmul.f32 %v1261, %v751
        %v1370 = vpack.c.bf16 %v1363, %v1362
        %v1371 = vpack.c.bf16 %v1365, %v1364
        %v1372 = vpack.c.bf16 %v1367, %v1366
        %v1373 = vpack.c.bf16 %v1369, %v1368
        %v1374 = vpack.c.bf16 %v1361, %v1360
        %v1375 = vlaneseq
        %v1376 = vshrl.u32 %v1375, 7
        %v1377 = vsub.s32 6, %v1376
        %v1378 = vrot.slane %v548, %v1377
        %1380 = vrot.lane.b32.xlu0 %v1374, 64
        %v1381 = vpop.permute.xlu0 %1380
        %v1383 = vsel %vm615, %v1381, 0
        %1385 = vmatprep.subr.bf16.mxu0 0
        %1386 = vmatpush1.bf16.msra.mxu0 0
        %1387 = vmatprep.subr.bf16.mxu0 0
        %1388 = vmatpush1.bf16.msra.mxu0 0
        %1389 = vmatprep.subr.bf16.mxu0 0
        %1390 = vmatpush1.bf16.msra.mxu0 0
        %1391 = vmatprep.subr.bf16.mxu0 0
        %1392 = vmatpush1.bf16.msra.mxu0 0
        %1393 = vmatprep.subr.bf16.mxu0 0
        %1394 = vmatpush1.bf16.msra.mxu0 %v1373
        %1395 = vmatprep.subr.bf16.mxu0 0
        %1396 = vmatpush1.bf16.msra.mxu0 %v1372
        %1397 = vmatprep.subr.bf16.mxu0 0
        %1398 = vmatpush1.bf16.msra.mxu0 %v1371
        %1399 = vmatprep.subr.bf16.mxu0 0
        %1400 = vmatpush1.bf16.msra.mxu0 %v1370
        %1401 = vmatprep.subr.bf16.mxu0 0
        %1402 = vmatpush2.bf16.msra.mxu0 0
        %1403 = vmatprep.subr.bf16.mxu0 0
        %1404 = vmatpush2.bf16.msra.mxu0 0
        %1405 = vmatprep.subr.bf16.mxu0 0
        %1406 = vmatpush2.bf16.msra.mxu0 0
        %1407 = vmatprep.subr.bf16.mxu0 0
        %1408 = vmatpush2.bf16.msra.mxu0 0
        %1409 = vmatprep.subr.bf16.mxu0 0
        %1410 = vmatpush2.bf16.msra.mxu0 0
        %1411 = vmatprep.subr.bf16.mxu0 0
        %1412 = vmatpush2.bf16.msra.mxu0 0
        %1413 = vmatprep.subr.bf16.mxu0 0
        %1414 = vmatpush2.bf16.msra.mxu0 0
        %1415 = vmatprep.subr.bf16.mxu0 0
        %1416 = vmatpush2.bf16.msra.mxu0 0
        %1417 = vmatprep.mubr.bf16.mxu0 0
        %1418 = vmatmul.mubr.bf16.gmra.mxu0 %v1383
        %v1419 = vpop.f32.mrf.mxu0
        %v1420 = vadd.f32 %v1378, %v1419
        %v1421 = vpop.f32.mrf.mxu0
        %v1422 = vpop.f32.mrf.mxu0
        %v1423 = vadd.f32 %v1378, %v1422
        %v1424 = vpop.f32.mrf.mxu0
        %1425 = vdwg.mxu0
        %v1426 = vsel %vm615, %v1420, 0.0
        %1427 = vadd.xlane.f32.xlu0 %v1426
        %v1428 = vpop.xlane.xlu0 %1427
        %v1429 = vsel %vm615, %v1423, 0.0
        %1430 = vadd.xlane.f32.xlu0 %v1429
        %v1431 = vpop.xlane.xlu0 %1430
        %v1432 = vmul.f32 %v1428, %v822
        %v1433 = vmul.f32 %v1431, %v822
        %v1434 = vmul.f32 %v1420, %v1420
        %v1435 = vmul.f32 %v1423, %v1423
        %v1436 = vsel %vm615, %v1434, 0.0
        %1437 = vadd.xlane.f32.xlu0 %v1436
        %v1438 = vpop.xlane.xlu0 %1437
        %v1439 = vsel %vm615, %v1435, 0.0
        %1440 = vadd.xlane.f32.xlu0 %v1439
        %v1441 = vpop.xlane.xlu0 %1440
        %v1442 = vmul.f32 %v1438, %v822
        %v1443 = vmul.f32 %v1441, %v822
        %v1444 = vmul.f32 %v1432, %v1432
        %v1445 = vmul.f32 %v1433, %v1433
        %v1446 = vsub.f32 %v1442, %v1444
        %v1447 = vsub.f32 %v1443, %v1445
        %v1448 = vsub.f32 %v1420, %v1432
        %v1449 = vsub.f32 %v1423, %v1433
        %v1450 = vadd.f32 %v1446, 1e-05
        %v1451 = vadd.f32 %v1447, 1e-05
        %v1452 = vrsqrt.pop %v1450
        %v1453 = vrsqrt.pop %v1451
        %v1454 = vmul.f32 %v1448, %v1452
        %v1455 = vmul.f32 %v1449, %v1453
        %v1456 = vlaneseq
        %v1457 = vshrl.u32 %v1456, 7
        %v1458 = vsub.s32 7, %v1457
        %v1459 = vrot.slane %v548, %v1458
        %v1460 = vmul.f32 %v1454, %v1459
        %v1461 = vmul.f32 %v1455, %v1459
        %v1462 = vlaneseq
        %v1463 = vshrl.u32 %v1462, 7
        %v1464 = vsub.s32 0, %v1463
        %v1465 = vrot.slane %v549, %v1464
        %v1466 = vadd.f32 %v1460, %v1465
        %v1467 = vadd.f32 %v1461, %v1465
        %v1468 = vld [vmem:[%s488] sm:$0x3]
        %v1469 = vpack.c.bf16 %v1468, %v1468
        %v1470 = vpack.c.bf16 %v1467, %v1466
        %v1472 = vsel %vm520, %v1469, 0
        %1474 = vmatprep.subr.bf16.mxu0 0
        %1475 = vmatpush1.bf16.msra.mxu0 0
        %1476 = vmatprep.subr.bf16.mxu0 0
        %1477 = vmatpush1.bf16.msra.mxu0 0
        %1478 = vmatprep.subr.bf16.mxu0 0
        %1479 = vmatpush1.bf16.msra.mxu0 0
        %1480 = vmatprep.subr.bf16.mxu0 0
        %1481 = vmatpush1.bf16.msra.mxu0 0
        %1482 = vmatprep.subr.bf16.mxu0 0
        %1483 = vmatpush1.bf16.msra.mxu0 0
        %1484 = vmatprep.subr.bf16.mxu0 0
        %1485 = vmatpush1.bf16.msra.mxu0 0
        %1486 = vmatprep.subr.bf16.mxu0 0
        %1487 = vmatpush1.bf16.msra.mxu0 0
        %1488 = vmatprep.subr.bf16.mxu0 0
        %1489 = vmatpush1.bf16.msra.mxu0 %v1470
        %1490 = vmatprep.subr.bf16.mxu0 0
        %1491 = vmatpush2.bf16.msra.mxu0 0
        %1492 = vmatprep.subr.bf16.mxu0 0
        %1493 = vmatpush2.bf16.msra.mxu0 0
        %1494 = vmatprep.subr.bf16.mxu0 0
        %1495 = vmatpush2.bf16.msra.mxu0 0
        %1496 = vmatprep.subr.bf16.mxu0 0
        %1497 = vmatpush2.bf16.msra.mxu0 0
        %1498 = vmatprep.subr.bf16.mxu0 0
        %1499 = vmatpush2.bf16.msra.mxu0 0
        %1500 = vmatprep.subr.bf16.mxu0 0
        %1501 = vmatpush2.bf16.msra.mxu0 0
        %1502 = vmatprep.subr.bf16.mxu0 0
        %1503 = vmatpush2.bf16.msra.mxu0 0
        %1504 = vmatprep.subr.bf16.mxu0 0
        %1505 = vmatpush2.bf16.msra.mxu0 0
        %1506 = vmatprep.mubr.bf16.mxu0 0
        %1507 = vmatmul.mubr.bf16.gmra.mxu0 %v1472
        %v1508 = vpop.f32.mrf.mxu0
        %v1509 = vadd.f32 0.0, %v1508
        %v1510 = vpop.f32.mrf.mxu0
        %v1511 = vpop.f32.mrf.mxu0
        %v1512 = vpop.f32.mrf.mxu0
        %1513 = vdwg.mxu0
        %v1514 = vpack.c.bf16 %v1509, %v1509
        %v1515 = vld [vmem:[#allocation10] sm:$0xf]
        %v1516 = vld [vmem:[#allocation10 + $0x4] sm:$0xf]
        %v1517 = vld [vmem:[#allocation10 + $0x8] sm:$0xf]
        %v1518 = vld [vmem:[#allocation10 + $0xc] sm:$0xf]
        %v1519 = vld [vmem:[#allocation10 + $0x10] sm:$0xf]
        %v1520 = vld [vmem:[#allocation10 + $0x14] sm:$0xf]
        %v1521 = vld [vmem:[#allocation10 + $0x18] sm:$0xf]
        %v1522 = vld [vmem:[#allocation10 + $0x1c] sm:$0xf]
        %v1523 = vld [vmem:[%s9] sm:$0x1]
        %v1524 = vlaneseq
        %v1525 = vshrl.u32 %v1524, 7
        %v1526 = vsub.s32 0, %v1525
        %v1527 = vrot.slane %v1523, %v1526
        %v1536 = vunpack.c.l.b16 %v1515
        %v1537 = vunpack.c.l.b16 %v1516
        %v1538 = vunpack.c.l.b16 %v1517
        %v1539 = vunpack.c.l.b16 %v1518
        %v1540 = vunpack.c.l.b16 %v1519
        %v1541 = vunpack.c.l.b16 %v1520
        %v1542 = vunpack.c.l.b16 %v1521
        %v1543 = vunpack.c.l.b16 %v1522
        %v1544 = vpack.c.b16 %v1537, %v1536
        %v1545 = vpack.c.b16 %v1539, %v1538
        %v1546 = vpack.c.b16 %v1541, %v1540
        %v1547 = vpack.c.b16 %v1543, %v1542
        %v1553 = vsel %vm615, %v1514, 0
        %1555 = vmatprep.subr.bf16.mxu0 0
        %1556 = vmatpush1.bf16.msra.mxu0 0
        %1557 = vmatprep.subr.bf16.mxu0 0
        %1558 = vmatpush1.bf16.msra.mxu0 0
        %1559 = vmatprep.subr.bf16.mxu0 0
        %1560 = vmatpush1.bf16.msra.mxu0 0
        %1561 = vmatprep.subr.bf16.mxu0 0
        %1562 = vmatpush1.bf16.msra.mxu0 0
        %1563 = vmatprep.subr.bf16.mxu0 0
        %1564 = vmatpush1.bf16.msra.mxu0 %v1547
        %1565 = vmatprep.subr.bf16.mxu0 0
        %1566 = vmatpush1.bf16.msra.mxu0 %v1546
        %1567 = vmatprep.subr.bf16.mxu0 0
        %1568 = vmatpush1.bf16.msra.mxu0 %v1545
        %1569 = vmatprep.subr.bf16.mxu0 0
        %1570 = vmatpush1.bf16.msra.mxu0 %v1544
        %1571 = vmatprep.subr.bf16.mxu0 0
        %1572 = vmatpush2.bf16.msra.mxu0 0
        %1573 = vmatprep.subr.bf16.mxu0 0
        %1574 = vmatpush2.bf16.msra.mxu0 0
        %1575 = vmatprep.subr.bf16.mxu0 0
        %1576 = vmatpush2.bf16.msra.mxu0 0
        %1577 = vmatprep.subr.bf16.mxu0 0
        %1578 = vmatpush2.bf16.msra.mxu0 0
        %1579 = vmatprep.subr.bf16.mxu0 0
        %1580 = vmatpush2.bf16.msra.mxu0 0
        %1581 = vmatprep.subr.bf16.mxu0 0
        %1582 = vmatpush2.bf16.msra.mxu0 0
        %1583 = vmatprep.subr.bf16.mxu0 0
        %1584 = vmatpush2.bf16.msra.mxu0 0
        %1585 = vmatprep.subr.bf16.mxu0 0
        %1586 = vmatpush2.bf16.msra.mxu0 0
        %1587 = vmatprep.mubr.bf16.mxu0 0
        %1588 = vmatmul.mubr.bf16.gmra.mxu0 %v1553
        %v1589 = vpop.f32.mrf.mxu0
        %v1590 = vadd.f32 %v1527, %v1589
        %v1591 = vpop.f32.mrf.mxu0
        %v1592 = vpop.f32.mrf.mxu0
        %v1593 = vpop.f32.mrf.mxu0
        %1594 = vdwg.mxu0
        %v1595 = vpack.c.bf16 %v1590, %v1590
        %v1596 = vld [vmem:[#allocation10 + $0x20] sm:$0xf]
        %v1597 = vld [vmem:[#allocation10 + $0x24] sm:$0xf]
        %v1598 = vld [vmem:[#allocation10 + $0x28] sm:$0xf]
        %v1599 = vld [vmem:[#allocation10 + $0x2c] sm:$0xf]
        %v1600 = vld [vmem:[#allocation10 + $0x30] sm:$0xf]
        %v1601 = vld [vmem:[#allocation10 + $0x34] sm:$0xf]
        %v1602 = vld [vmem:[#allocation10 + $0x38] sm:$0xf]
        %v1603 = vld [vmem:[#allocation10 + $0x3c] sm:$0xf]
        %v1604 = vld [vmem:[#allocation10 + $0x40] sm:$0xf]
        %v1605 = vld [vmem:[#allocation10 + $0x44] sm:$0xf]
        %v1606 = vld [vmem:[#allocation10 + $0x48] sm:$0xf]
        %v1607 = vld [vmem:[#allocation10 + $0x4c] sm:$0xf]
        %v1608 = vld [vmem:[#allocation10 + $0x50] sm:$0xf]
        %v1609 = vld [vmem:[#allocation10 + $0x54] sm:$0xf]
        %v1610 = vld [vmem:[#allocation10 + $0x58] sm:$0xf]
        %v1611 = vld [vmem:[#allocation10 + $0x5c] sm:$0xf]
        %v1612 = vld [vmem:[%s9 + $0x1] sm:$0x1]
        %v1613 = vlaneseq
        %v1614 = vshrl.u32 %v1613, 7
        %v1615 = vsub.s32 0, %v1614
        %v1616 = vrot.slane %v1612, %v1615
        %v1633 = vunpack.c.l.b16 %v1596
        %v1634 = vunpack.c.l.b16 %v1597
        %v1635 = vunpack.c.l.b16 %v1598
        %v1636 = vunpack.c.l.b16 %v1599
        %v1637 = vunpack.c.l.b16 %v1600
        %v1638 = vunpack.c.l.b16 %v1601
        %v1639 = vunpack.c.l.b16 %v1602
        %v1640 = vunpack.c.l.b16 %v1603
        %v1641 = vunpack.c.l.b16 %v1604
        %v1642 = vunpack.c.l.b16 %v1605
        %v1643 = vunpack.c.l.b16 %v1606
        %v1644 = vunpack.c.l.b16 %v1607
        %v1645 = vunpack.c.l.b16 %v1608
        %v1646 = vunpack.c.l.b16 %v1609
        %v1647 = vunpack.c.l.b16 %v1610
        %v1648 = vunpack.c.l.b16 %v1611
        %v1649 = vpack.c.b16 %v1634, %v1633
        %v1650 = vpack.c.b16 %v1636, %v1635
        %v1651 = vpack.c.b16 %v1638, %v1637
        %v1652 = vpack.c.b16 %v1640, %v1639
        %v1653 = vpack.c.b16 %v1642, %v1641
        %v1654 = vpack.c.b16 %v1644, %v1643
        %v1655 = vpack.c.b16 %v1646, %v1645
        %v1656 = vpack.c.b16 %v1648, %v1647
        %1665 = vmatprep.subr.bf16.mxu0 0
        %1666 = vmatpush1.bf16.msra.mxu0 %v1656
        %1667 = vmatprep.subr.bf16.mxu0 0
        %1668 = vmatpush1.bf16.msra.mxu0 %v1655
        %1669 = vmatprep.subr.bf16.mxu0 0
        %1670 = vmatpush1.bf16.msra.mxu0 %v1654
        %1671 = vmatprep.subr.bf16.mxu0 0
        %1672 = vmatpush1.bf16.msra.mxu0 %v1653
        %1673 = vmatprep.subr.bf16.mxu0 0
        %1674 = vmatpush1.bf16.msra.mxu0 %v1652
        %1675 = vmatprep.subr.bf16.mxu0 0
        %1676 = vmatpush1.bf16.msra.mxu0 %v1651
        %1677 = vmatprep.subr.bf16.mxu0 0
        %1678 = vmatpush1.bf16.msra.mxu0 %v1650
        %1679 = vmatprep.subr.bf16.mxu0 0
        %1680 = vmatpush1.bf16.msra.mxu0 %v1649
        %1681 = vmatprep.subr.bf16.mxu0 0
        %1682 = vmatpush2.bf16.msra.mxu0 0
        %1683 = vmatprep.subr.bf16.mxu0 0
        %1684 = vmatpush2.bf16.msra.mxu0 0
        %1685 = vmatprep.subr.bf16.mxu0 0
        %1686 = vmatpush2.bf16.msra.mxu0 0
        %1687 = vmatprep.subr.bf16.mxu0 0
        %1688 = vmatpush2.bf16.msra.mxu0 0
        %1689 = vmatprep.subr.bf16.mxu0 0
        %1690 = vmatpush2.bf16.msra.mxu0 0
        %1691 = vmatprep.subr.bf16.mxu0 0
        %1692 = vmatpush2.bf16.msra.mxu0 0
        %1693 = vmatprep.subr.bf16.mxu0 0
        %1694 = vmatpush2.bf16.msra.mxu0 0
        %1695 = vmatprep.subr.bf16.mxu0 0
        %1696 = vmatpush2.bf16.msra.mxu0 0
        %1697 = vmatprep.mubr.bf16.mxu0 0
        %1698 = vmatmul.mubr.bf16.gmra.mxu0 %v1595
        %v1699 = vpop.f32.mrf.mxu0
        %v1700 = vadd.f32 %v1616, %v1699
        %v1701 = vpop.f32.mrf.mxu0
        %v1702 = vpop.f32.mrf.mxu0
        %v1703 = vpop.f32.mrf.mxu0
        %1704 = vdwg.mxu0
        %v1705 = vpack.c.bf16 %v1700, %v1700
        %v1706 = vld [vmem:[#allocation10 + $0x60] sm:$0xf]
        %v1707 = vld [vmem:[#allocation10 + $0x64] sm:$0xf]
        %v1708 = vld [vmem:[#allocation10 + $0x68] sm:$0xf]
        %v1709 = vld [vmem:[#allocation10 + $0x6c] sm:$0xf]
        %v1710 = vld [vmem:[#allocation10 + $0x70] sm:$0xf]
        %v1711 = vld [vmem:[#allocation10 + $0x74] sm:$0xf]
        %v1712 = vld [vmem:[#allocation10 + $0x78] sm:$0xf]
        %v1713 = vld [vmem:[#allocation10 + $0x7c] sm:$0xf]
        %v1714 = vld [vmem:[#allocation10 + $0x80] sm:$0xf]
        %v1715 = vld [vmem:[#allocation10 + $0x84] sm:$0xf]
        %v1716 = vld [vmem:[#allocation10 + $0x88] sm:$0xf]
        %v1717 = vld [vmem:[#allocation10 + $0x8c] sm:$0xf]
        %v1718 = vld [vmem:[#allocation10 + $0x90] sm:$0xf]
        %v1719 = vld [vmem:[#allocation10 + $0x94] sm:$0xf]
        %v1720 = vld [vmem:[#allocation10 + $0x98] sm:$0xf]
        %v1721 = vld [vmem:[#allocation10 + $0x9c] sm:$0xf]
        %v1722 = vld [vmem:[%s9 + $0x2] sm:$0x1]
        %v1723 = vlaneseq
        %v1724 = vshrl.u32 %v1723, 7
        %v1725 = vsub.s32 0, %v1724
        %v1726 = vrot.slane %v1722, %v1725
        %v1743 = vunpack.c.l.b16 %v1706
        %v1744 = vunpack.c.l.b16 %v1707
        %v1745 = vunpack.c.l.b16 %v1708
        %v1746 = vunpack.c.l.b16 %v1709
        %v1747 = vunpack.c.l.b16 %v1710
        %v1748 = vunpack.c.l.b16 %v1711
        %v1749 = vunpack.c.l.b16 %v1712
        %v1750 = vunpack.c.l.b16 %v1713
        %v1751 = vunpack.c.l.b16 %v1714
        %v1752 = vunpack.c.l.b16 %v1715
        %v1753 = vunpack.c.l.b16 %v1716
        %v1754 = vunpack.c.l.b16 %v1717
        %v1755 = vunpack.c.l.b16 %v1718
        %v1756 = vunpack.c.l.b16 %v1719
        %v1757 = vunpack.c.l.b16 %v1720
        %v1758 = vunpack.c.l.b16 %v1721
        %v1759 = vpack.c.b16 %v1744, %v1743
        %v1760 = vpack.c.b16 %v1746, %v1745
        %v1761 = vpack.c.b16 %v1748, %v1747
        %v1762 = vpack.c.b16 %v1750, %v1749
        %v1763 = vpack.c.b16 %v1752, %v1751
        %v1764 = vpack.c.b16 %v1754, %v1753
        %v1765 = vpack.c.b16 %v1756, %v1755
        %v1766 = vpack.c.b16 %v1758, %v1757
        %1775 = vmatprep.subr.bf16.mxu0 0
        %1776 = vmatpush1.bf16.msra.mxu0 %v1766
        %1777 = vmatprep.subr.bf16.mxu0 0
        %1778 = vmatpush1.bf16.msra.mxu0 %v1765
        %1779 = vmatprep.subr.bf16.mxu0 0
        %1780 = vmatpush1.bf16.msra.mxu0 %v1764
        %1781 = vmatprep.subr.bf16.mxu0 0
        %1782 = vmatpush1.bf16.msra.mxu0 %v1763
        %1783 = vmatprep.subr.bf16.mxu0 0
        %1784 = vmatpush1.bf16.msra.mxu0 %v1762
        %1785 = vmatprep.subr.bf16.mxu0 0
        %1786 = vmatpush1.bf16.msra.mxu0 %v1761
        %1787 = vmatprep.subr.bf16.mxu0 0
        %1788 = vmatpush1.bf16.msra.mxu0 %v1760
        %1789 = vmatprep.subr.bf16.mxu0 0
        %1790 = vmatpush1.bf16.msra.mxu0 %v1759
        %1791 = vmatprep.subr.bf16.mxu0 0
        %1792 = vmatpush2.bf16.msra.mxu0 0
        %1793 = vmatprep.subr.bf16.mxu0 0
        %1794 = vmatpush2.bf16.msra.mxu0 0
        %1795 = vmatprep.subr.bf16.mxu0 0
        %1796 = vmatpush2.bf16.msra.mxu0 0
        %1797 = vmatprep.subr.bf16.mxu0 0
        %1798 = vmatpush2.bf16.msra.mxu0 0
        %1799 = vmatprep.subr.bf16.mxu0 0
        %1800 = vmatpush2.bf16.msra.mxu0 0
        %1801 = vmatprep.subr.bf16.mxu0 0
        %1802 = vmatpush2.bf16.msra.mxu0 0
        %1803 = vmatprep.subr.bf16.mxu0 0
        %1804 = vmatpush2.bf16.msra.mxu0 0
        %1805 = vmatprep.subr.bf16.mxu0 0
        %1806 = vmatpush2.bf16.msra.mxu0 0
        %1807 = vmatprep.mubr.bf16.mxu0 0
        %1808 = vmatmul.mubr.bf16.gmra.mxu0 %v1705
        %v1809 = vpop.f32.mrf.mxu0
        %v1810 = vadd.f32 %v1726, %v1809
        %v1811 = vpop.f32.mrf.mxu0
        %v1812 = vpop.f32.mrf.mxu0
        %v1813 = vpop.f32.mrf.mxu0
        %1814 = vdwg.mxu0
        %v1815 = vmax.f32 %v1810, 0.0
        %v1816 = vpack.c.bf16 %v1815, %v1815
        %v1817 = vld [vmem:[#allocation10 + $0xa0] sm:$0xf]
        %v1818 = vld [vmem:[#allocation10 + $0xa4] sm:$0xf]
        %v1819 = vld [vmem:[#allocation10 + $0xa8] sm:$0xf]
        %v1820 = vld [vmem:[#allocation10 + $0xac] sm:$0xf]
        %v1821 = vld [vmem:[#allocation10 + $0xb0] sm:$0xf]
        %v1822 = vld [vmem:[#allocation10 + $0xb4] sm:$0xf]
        %v1823 = vld [vmem:[#allocation10 + $0xb8] sm:$0xf]
        %v1824 = vld [vmem:[#allocation10 + $0xbc] sm:$0xf]
        %v1825 = vld [vmem:[#allocation10 + $0xc0] sm:$0xf]
        %v1826 = vld [vmem:[#allocation10 + $0xc4] sm:$0xf]
        %v1827 = vld [vmem:[#allocation10 + $0xc8] sm:$0xf]
        %v1828 = vld [vmem:[#allocation10 + $0xcc] sm:$0xf]
        %v1829 = vld [vmem:[#allocation10 + $0xd0] sm:$0xf]
        %v1830 = vld [vmem:[#allocation10 + $0xd4] sm:$0xf]
        %v1831 = vld [vmem:[#allocation10 + $0xd8] sm:$0xf]
        %v1832 = vld [vmem:[#allocation10 + $0xdc] sm:$0xf]
        %v1833 = vld [vmem:[%s9 + $0x3] sm:$0x1]
        %v1834 = vlaneseq
        %v1835 = vshrl.u32 %v1834, 7
        %v1836 = vsub.s32 0, %v1835
        %v1837 = vrot.slane %v1833, %v1836
        %v1854 = vunpack.c.l.b16 %v1817
        %v1855 = vunpack.c.l.b16 %v1818
        %v1856 = vunpack.c.l.b16 %v1819
        %v1857 = vunpack.c.l.b16 %v1820
        %v1858 = vunpack.c.l.b16 %v1821
        %v1859 = vunpack.c.l.b16 %v1822
        %v1860 = vunpack.c.l.b16 %v1823
        %v1861 = vunpack.c.l.b16 %v1824
        %v1862 = vunpack.c.l.b16 %v1825
        %v1863 = vunpack.c.l.b16 %v1826
        %v1864 = vunpack.c.l.b16 %v1827
        %v1865 = vunpack.c.l.b16 %v1828
        %v1866 = vunpack.c.l.b16 %v1829
        %v1867 = vunpack.c.l.b16 %v1830
        %v1868 = vunpack.c.l.b16 %v1831
        %v1869 = vunpack.c.l.b16 %v1832
        %v1870 = vpack.c.b16 %v1855, %v1854
        %v1871 = vpack.c.b16 %v1857, %v1856
        %v1872 = vpack.c.b16 %v1859, %v1858
        %v1873 = vpack.c.b16 %v1861, %v1860
        %v1874 = vpack.c.b16 %v1863, %v1862
        %v1875 = vpack.c.b16 %v1865, %v1864
        %v1876 = vpack.c.b16 %v1867, %v1866
        %v1877 = vpack.c.b16 %v1869, %v1868
        %1886 = vmatprep.subr.bf16.mxu0 0
        %1887 = vmatpush1.bf16.msra.mxu0 %v1877
        %1888 = vmatprep.subr.bf16.mxu0 0
        %1889 = vmatpush1.bf16.msra.mxu0 %v1876
        %1890 = vmatprep.subr.bf16.mxu0 0
        %1891 = vmatpush1.bf16.msra.mxu0 %v1875
        %1892 = vmatprep.subr.bf16.mxu0 0
        %1893 = vmatpush1.bf16.msra.mxu0 %v1874
        %1894 = vmatprep.subr.bf16.mxu0 0
        %1895 = vmatpush1.bf16.msra.mxu0 %v1873
        %1896 = vmatprep.subr.bf16.mxu0 0
        %1897 = vmatpush1.bf16.msra.mxu0 %v1872
        %1898 = vmatprep.subr.bf16.mxu0 0
        %1899 = vmatpush1.bf16.msra.mxu0 %v1871
        %1900 = vmatprep.subr.bf16.mxu0 0
        %1901 = vmatpush1.bf16.msra.mxu0 %v1870
        %1902 = vmatprep.subr.bf16.mxu0 0
        %1903 = vmatpush2.bf16.msra.mxu0 0
        %1904 = vmatprep.subr.bf16.mxu0 0
        %1905 = vmatpush2.bf16.msra.mxu0 0
        %1906 = vmatprep.subr.bf16.mxu0 0
        %1907 = vmatpush2.bf16.msra.mxu0 0
        %1908 = vmatprep.subr.bf16.mxu0 0
        %1909 = vmatpush2.bf16.msra.mxu0 0
        %1910 = vmatprep.subr.bf16.mxu0 0
        %1911 = vmatpush2.bf16.msra.mxu0 0
        %1912 = vmatprep.subr.bf16.mxu0 0
        %1913 = vmatpush2.bf16.msra.mxu0 0
        %1914 = vmatprep.subr.bf16.mxu0 0
        %1915 = vmatpush2.bf16.msra.mxu0 0
        %1916 = vmatprep.subr.bf16.mxu0 0
        %1917 = vmatpush2.bf16.msra.mxu0 0
        %1918 = vmatprep.mubr.bf16.mxu0 0
        %1919 = vmatmul.mubr.bf16.gmra.mxu0 %v1816
        %v1920 = vpop.f32.mrf.mxu0
        %v1921 = vadd.f32 %v1837, %v1920
        %v1922 = vpop.f32.mrf.mxu0
        %v1923 = vpop.f32.mrf.mxu0
        %v1924 = vpop.f32.mrf.mxu0
        %1925 = vdwg.mxu0
        %v1926 = vxor.u32 %v1921, 2147483648
        %v1927 = vmul.f32 %v1926, 1.442695
        %v1928 = vpow.pop %v1927
        %v1929 = vadd.f32 %v1928, 1.0
        %v1930 = vrcp.pop %v1929
        %v1931 = vmul.f32 1.0, %v1930
        %vm1932 = vcmask 1024
        %1933 = vst.msk [vmem:[%s492] sm:$0x3] %vm1932, %v1931
        %p1934 = scmp.lt.s32.totalorder %s29, 1
        %s1935 = scalar_select %p1934, %s29, 1
        %s1936 = smul.addr %s1935, 2
        %s1937 = scalar_lea.vmem %s10, %s1936
        // Predicated region
        $region85: #{explainer_forward.1} parent=59 // pred_check
          %p1938 = pneg %p272
        $region86: #{explainer_forward.1} parent=59 // pred_check_branch
          %1940 = sbr.rel (%p1938) target = $region88
        $region87: #{explainer_forward.1} parent=59 // pred_region
          _
        $region88: #{explainer_forward.1} parent=59 // pred_fallthru
          _
      $region60: #{explainer_forward.1} parent=5 // pred_fallthru
        _
      %p1941 = scmp.le.s32.totalorder 2, %s24
      // Predicated region
      $region89: #{explainer_forward.1} parent=5 // pred_check
        %p1942 = pneg %p1941
      $region90: #{explainer_forward.1} parent=5 // pred_check_branch
        %1944 = sbr.rel (%p1942) target = $region92
      $region91: #{explainer_forward.1} parent=5 // pred_region
        %s1945 = ssub.s32 %s24, 2
        // Predicated region
        $region93: #{explainer_forward.1} parent=91 // pred_check
          %p1946 = pneg %p278
        $region94: #{explainer_forward.1} parent=91 // pred_check_branch
          %1948 = sbr.rel (%p1946) target = $region96
        $region95: #{explainer_forward.1} parent=91 // pred_region
          %p1949 = scmp.lt.s32.totalorder %s30, 1
          %s1950 = scalar_select %p1949, %s30, 1
          %s1951 = smul.addr %s1950, 2
          %s1952 = scalar_lea.vmem %s10, %s1951
        $region96: #{explainer_forward.1} parent=91 // pred_fallthru
          _
      $region92: #{explainer_forward.1} parent=5 // pred_fallthru
        _
    $region6: #{explainer_forward.1} parent=1 // loop_footer
      %s28 = sadd.s32 1, %s24
    $region7: #{explainer_forward.1} parent=1 // loop_footer_branch
      %23 = sbr.rel target = $region3
    $region8: #{explainer_forward.1} parent=1 // loop_exit
      _
    %1953 = vsyncpa [#allocation3], 1
    %s1954 = scalar_lea.sflag [#allocation3], 1
    %1955 = vsyncpa %s1954, 1
    %1956 = vsyncpa [#allocation5], 1
    %s1957 = scalar_lea.sflag [#allocation5], 1
    %1958 = vsyncpa %s1957, 1
    %1959 = vsyncpa [#allocation8], 1
    %1960 = vsyncpa [#allocation11], 1

</llo_original>
